<compile_context>
chip_gen: v7x
topology: tpu7x:2x2x1
jax: 0.10.0
libtpu: 0.0.40
codegen_flags: <defaults>
</compile_context>

<pallas_src>
import math
import jax
import jax.numpy as jnp
from jax import lax
from jax.experimental import pallas as pl
from jax.experimental.pallas import tpu as pltpu

# ---------------- config (consistent with the module) ----------------
BATCH = 2
SEQ = 8
D_MODEL = 32
N_HEADS = 4
HEAD_DIM = D_MODEL // N_HEADS          # 8
RANK = 8
NUM_EXPERTS = 4
D_FF = 64
LN_EPS = 1e-5
SCALE = 1.0 / math.sqrt(RANK)
N_ROWS = BATCH * SEQ                   # 16  (batch folded into rows)
N_ATT = N_HEADS * N_ROWS               # 64  (head-major attention rows)
NEG_INF = -1e30

# ---- packed bf16 weight blob: (32, 512); every slice starts on a 128-lane boundary ----
W_COLS = 512
C_QKVLOW = 0        # (32, 96)  fused  u_qkv@v_qkv  folded with per-head u_attn
C_ATTOUT = 128      # (32, 32)  fused  v_attn(blockdiag)@u_out@v_out
C_W1 = 256          # (32, 256) fused  per-expert eu1@ev1, experts concatenated in lanes

# ---- packed f32 misc blob: (112, 256); each item at a sublane multiple of 8, lane 0 ----
F_COLS = NUM_EXPERTS * D_FF            # 256
R_LN1G, R_LN1B, R_LN2G, R_LN2B = 0, 8, 16, 24
R_BQKV, R_BOUT, R_GATEB, R_EB1 = 32, 40, 48, 56
R_GATEW = 64        # (32, 4)   gate weight in NN layout
R_EXPAND = 96       # (4, 256)  expert -> FFN-lane expansion (ones blocks)
R_EB2 = 104         # (4, 32)   per-expert output biases
F_ROWS = 112


# ---------------- helpers shared by the kernel AND the reference ----------------
def _layernorm(x, g, b):
    mu = jnp.mean(x, axis=-1, keepdims=True)
    var = jnp.mean((x - mu) ** 2, axis=-1, keepdims=True)
    return (x - mu) * lax.rsqrt(var + LN_EPS) * g + b


def _softmax(x):
    x = x - jnp.max(x, axis=-1, keepdims=True)
    e = jnp.exp(x)
    return e / jnp.sum(e, axis=-1, keepdims=True)


def _top2_weights(p):
    """Exact top-2 of gate probs p (N, E), first-index tie-break, renormalized."""
    ne = p.shape[-1]
    eidx = lax.broadcasted_iota(jnp.int32, p.shape, 1).astype(jnp.float32)
    big = jnp.float32(ne)
    m1 = jnp.max(p, axis=-1, keepdims=True)
    i1 = jnp.min(jnp.where(p >= m1, eidx, big), axis=-1, keepdims=True)
    t1 = eidx == i1
    p2 = jnp.where(t1, jnp.float32(-1.0), p)            # probs are >= 0, -1 excludes
    m2 = jnp.max(p2, axis=-1, keepdims=True)
    i2 = jnp.min(jnp.where(p2 >= m2, eidx, big), axis=-1, keepdims=True)
    t2 = eidx == i2
    return (jnp.where(t1, m1, 0.0) + jnp.where(t2, m2, 0.0)) / (m1 + m2)


def _bmm(a, w):
    """bf16 MXU matmul with f32 accumulation; the only cast point per stage."""
    return jnp.dot(a.astype(jnp.bfloat16), w.astype(jnp.bfloat16),
                   preferred_element_type=jnp.float32)


# ---------------- the kernel ----------------
def transformer_block_kernel(x_ref, w_ref, w2_ref, f_ref, o_ref):
    x = x_ref[...]                                                    # (16, 32) f32

    # ---------- sublayer 1: low-rank attention over LayerNorm(x) ----------
    h = _layernorm(x, f_ref[R_LN1G:R_LN1G + 1, 0:D_MODEL],
                   f_ref[R_LN1B:R_LN1B + 1, 0:D_MODEL])

    # one fused projection straight to the per-head rank space: [q_low | k_low | v_low]
    qkv_low = _bmm(h, w_ref[:, C_QKVLOW:C_QKVLOW + 3 * D_MODEL]) \
        + f_ref[R_BQKV:R_BQKV + 1, 0:3 * D_MODEL]                     # (16, 96)

    # head blocks (8 lanes each) -> head-major rows: (64, 8), row = head*16 + batch*8 + seq
    def heads_to_rows(base):
        return jnp.concatenate(
            [qkv_low[:, base + hd * RANK: base + (hd + 1) * RANK] for hd in range(N_HEADS)],
            axis=0)

    q_t = heads_to_rows(0)
    k_t = heads_to_rows(D_MODEL)
    v_t = heads_to_rows(2 * D_MODEL)

    # one masked whole-matrix attention over all (head, batch) 8-row blocks
    s = lax.dot_general(q_t, k_t, (((1,), (1,)), ((), ())),
                        preferred_element_type=jnp.float32) * SCALE   # (64, 64)
    ri = lax.broadcasted_iota(jnp.int32, (N_ATT, N_ATT), 0)
    ci = lax.broadcasted_iota(jnp.int32, (N_ATT, N_ATT), 1)
    same_block = (ri & (-SEQ)) == (ci & (-SEQ))       # same 8-row (head, batch) block
    s = jnp.where(same_block, s, NEG_INF)
    a = _softmax(s)                                   # masked cols -> exactly 0
    ctx_t = jnp.dot(a, v_t, preferred_element_type=jnp.float32)       # (64, 8)

    # back to (16, 32) head-blocked lanes
    ctx_low = jnp.concatenate(
        [ctx_t[hd * N_ROWS:(hd + 1) * N_ROWS, :] for hd in range(N_HEADS)], axis=1)

    attn_out = _bmm(ctx_low, w_ref[:, C_ATTOUT:C_ATTOUT + D_MODEL]) \
        + f_ref[R_BOUT:R_BOUT + 1, 0:D_MODEL]
    x1 = x + attn_out                                                 # dropout == identity

    # ---------- sublayer 2: Mixture-of-Ranks FFN over LayerNorm(x1) ----------
    h2 = _layernorm(x1, f_ref[R_LN2G:R_LN2G + 1, 0:D_MODEL],
                    f_ref[R_LN2B:R_LN2B + 1, 0:D_MODEL])

    # f32 gate (matches the module's f32 nn.Linear), NN layout -> no RHS transpose
    logits = jnp.dot(h2, f_ref[R_GATEW:R_GATEW + D_MODEL, 0:NUM_EXPERTS],
                     preferred_element_type=jnp.float32) \
        + f_ref[R_GATEB:R_GATEB + 1, 0:NUM_EXPERTS]                   # (16, 4)
    wg = _top2_weights(_softmax(logits))                              # (16, 4)

    # all 4 experts at once with host-fused dense weights
    h_all = jnp.maximum(
        _bmm(h2, w_ref[:, C_W1:C_W1 + NUM_EXPERTS * D_FF])
        + f_ref[R_EB1:R_EB1 + 1, 0:NUM_EXPERTS * D_FF], 0.0)          # (16, 256)
    wg_exp = jnp.dot(wg, f_ref[R_EXPAND:R_EXPAND + NUM_EXPERTS, :],
                     preferred_element_type=jnp.float32)              # (16, 256)
    moe = _bmm(h_all * wg_exp, w2_ref[...])                           # (16, 32)
    moe = moe + jnp.dot(wg, f_ref[R_EB2:R_EB2 + NUM_EXPERTS, 0:D_MODEL],
                        preferred_element_type=jnp.float32)

    o_ref[...] = x1 + moe


def transformer_block(x, w_blob, w2_blob, f_blob):
    B, S, D = x.shape
    x2d = x.reshape(B * S, D)                 # fold batch into rows host-side (free)
    out2d = pl.pallas_call(
        transformer_block_kernel,
        out_shape=jax.ShapeDtypeStruct((B * S, D), jnp.float32),
        grid=(1,),
        in_specs=[
            pl.BlockSpec((B * S, D), lambda i: (0, 0)),
            pl.BlockSpec((D_MODEL, W_COLS), lambda i: (0, 0)),
            pl.BlockSpec((NUM_EXPERTS * D_FF, D_MODEL), lambda i: (0, 0)),
            pl.BlockSpec((F_ROWS, F_COLS), lambda i: (0, 0)),
        ],
        out_specs=pl.BlockSpec((B * S, D), lambda i: (0, 0)),
        compiler_params=pltpu.CompilerParams(dimension_semantics=("arbitrary",)),
    )(x2d, w_blob, w2_blob, f_blob)
    return out2d.reshape(B, S, D)


# ---------------- host-side fusion & packing ----------------
def _blockdiag(blocks):
    rr = sum(b.shape[0] for b in blocks)
    cc = sum(b.shape[1] for b in blocks)
    out = jnp.zeros((rr, cc), blocks[0].dtype)
    r = c = 0
    for blk in blocks:
        out = out.at[r:r + blk.shape[0], c:c + blk.shape[1]].set(blk)
        r += blk.shape[0]
        c += blk.shape[1]
    return out


def fuse_params(params):
    """Fuse every low-rank factor pair that has no nonlinearity in between (f32)."""
    (g1, b1, g2, b2, u_qkv, v_qkv, b_qkv, u_out, v_out, b_out,
     u_attn, v_attn, gate_w, gate_b, eu1, ev1, eb1, eu2, ev2, eb2) = params

    u_att_blk = _blockdiag([u_attn[h] for h in range(N_HEADS)])       # (32, 32)
    v_att_blk = _blockdiag([v_attn[h] for h in range(N_HEADS)])       # (32, 32)

    w_qkv = u_qkv @ v_qkv                                             # (32, 96)
    w_qkv_low = jnp.concatenate(
        [w_qkv[:, i * D_MODEL:(i + 1) * D_MODEL] @ u_att_blk for i in range(3)], axis=1)
    b_qkv_low = jnp.concatenate(
        [b_qkv[:, i * D_MODEL:(i + 1) * D_MODEL] @ u_att_blk for i in range(3)], axis=1)

    w_att_out = v_att_blk @ u_out @ v_out                             # (32, 32)

    w1 = jnp.concatenate([eu1[e] @ ev1[e] for e in range(NUM_EXPERTS)], axis=1)   # (32, 256)
    eb1_cat = jnp.concatenate([eb1[e] for e in range(NUM_EXPERTS)], axis=1)       # (1, 256)
    w2 = jnp.concatenate([eu2[e] @ ev2[e] for e in range(NUM_EXPERTS)], axis=0)   # (256, 32)
    eb2_stk = jnp.concatenate([eb2[e] for e in range(NUM_EXPERTS)], axis=0)       # (4, 32)

    return dict(g1=g1, b1=b1, g2=g2, b2=b2,
                w_qkv_low=w_qkv_low, b_qkv_low=b_qkv_low,
                w_att_out=w_att_out, b_out=b_out,
                gate_w=gate_w, gate_b=gate_b,
                w1=w1, eb1=eb1_cat, w2=w2, eb2=eb2_stk)


def pack_params(fused):
    bf = lambda a: a.astype(jnp.bfloat16)

    W = jnp.zeros((D_MODEL, W_COLS), jnp.bfloat16)
    W = W.at[:, C_QKVLOW:C_QKVLOW + 3 * D_MODEL].set(bf(fused["w_qkv_low"]))
    W = W.at[:, C_ATTOUT:C_ATTOUT + D_MODEL].set(bf(fused["w_att_out"]))
    W = W.at[:, C_W1:C_W1 + NUM_EXPERTS * D_FF].set(bf(fused["w1"]))

    W2 = bf(fused["w2"])                                              # (256, 32)

    F = jnp.zeros((F_ROWS, F_COLS), jnp.float32)
    F = F.at[R_LN1G, 0:D_MODEL].set(fused["g1"][0])
    F = F.at[R_LN1B, 0:D_MODEL].set(fused["b1"][0])
    F = F.at[R_LN2G, 0:D_MODEL].set(fused["g2"][0])
    F = F.at[R_LN2B, 0:D_MODEL].set(fused["b2"][0])
    F = F.at[R_BQKV, 0:3 * D_MODEL].set(fused["b_qkv_low"][0])
    F = F.at[R_BOUT, 0:D_MODEL].set(fused["b_out"][0])
    F = F.at[R_GATEB, 0:NUM_EXPERTS].set(fused["gate_b"][0])
    F = F.at[R_EB1, 0:NUM_EXPERTS * D_FF].set(fused["eb1"][0])
    F = F.at[R_GATEW:R_GATEW + D_MODEL, 0:NUM_EXPERTS].set(fused["gate_w"])
    expand = jnp.repeat(jnp.eye(NUM_EXPERTS, dtype=jnp.float32), D_FF, axis=1)
    F = F.at[R_EXPAND:R_EXPAND + NUM_EXPERTS, 0:NUM_EXPERTS * D_FF].set(expand)
    F = F.at[R_EB2:R_EB2 + NUM_EXPERTS, 0:D_MODEL].set(fused["eb2"])
    return W, W2, F


# ---------------- plain-JAX reference (same math & cast points, per-head / per-expert loops) ----------------
def reference_block(x, fused):
    HI = jax.lax.Precision.HIGHEST
    B, S, D = x.shape
    xb = x.reshape(B * S, D)

    h = _layernorm(xb, fused["g1"], fused["b1"])
    qkv_low = _bmm(h, fused["w_qkv_low"]) + fused["b_qkv_low"]

    ctx_low = jnp.zeros((B * S, D), jnp.float32)
    for b in range(B):
        r0 = b * S
        for hd in range(N_HEADS):
            c0 = hd * RANK
            ql = qkv_low[r0:r0 + S, c0:c0 + RANK]
            kl = qkv_low[r0:r0 + S, D + c0:D + c0 + RANK]
            vl = qkv_low[r0:r0 + S, 2 * D + c0:2 * D + c0 + RANK]
            attn = _softmax(jnp.dot(ql, kl.T, precision=HI) * SCALE)
            ctx_low = ctx_low.at[r0:r0 + S, c0:c0 + RANK].set(
                jnp.dot(attn, vl, precision=HI))

    x1 = xb + (_bmm(ctx_low, fused["w_att_out"]) + fused["b_out"])

    h2 = _layernorm(x1, fused["g2"], fused["b2"])
    logits = jnp.dot(h2, fused["gate_w"], precision=HI) + fused["gate_b"]
    wg = _top2_weights(_softmax(logits))

    h_all = jnp.maximum(_bmm(h2, fused["w1"]) + fused["eb1"], 0.0)
    moe = jnp.zeros_like(x1)
    for e in range(NUM_EXPERTS):
        he = h_all[:, e * D_FF:(e + 1) * D_FF]
        moe = moe + _bmm(he * wg[:, e:e + 1], fused["w2"][e * D_FF:(e + 1) * D_FF, :]) \
                  + wg[:, e:e + 1] * fused["eb2"][e]

    return (x1 + moe).reshape(B, S, D)


# ---------------- parameter init (module-like scales; biases/LN randomized to exercise paths) ----------------
def init_params(key):
    ks = jax.random.split(key, 20)
    n = lambda k, shape, s=1.0: s * jax.random.normal(k, shape, jnp.float32)
    g1 = 1.0 + 0.1 * n(ks[0], (1, D_MODEL)); b1 = 0.1 * n(ks[1], (1, D_MODEL))
    g2 = 1.0 + 0.1 * n(ks[2], (1, D_MODEL)); b2 = 0.1 * n(ks[3], (1, D_MODEL))
    u_qkv = n(ks[4], (D_MODEL, RANK), 1.0 / math.sqrt(D_MODEL))
    v_qkv = n(ks[5], (RANK, 3 * D_MODEL), 1.0 / math.sqrt(RANK))
    b_qkv = 0.1 * n(ks[6], (1, 3 * D_MODEL))
    u_out = n(ks[7], (D_MODEL, RANK), 1.0 / math.sqrt(D_MODEL))
    v_out = n(ks[8], (RANK, D_MODEL), 1.0 / math.sqrt(RANK))
    b_out = 0.1 * n(ks[9], (1, D_MODEL))
    u_attn = n(ks[10], (N_HEADS, HEAD_DIM, RANK), 1.0 / math.sqrt(HEAD_DIM))
    v_attn = n(ks[11], (N_HEADS, RANK, HEAD_DIM), 1.0 / math.sqrt(RANK))
    gate_w = 0.3 * n(ks[12], (D_MODEL, NUM_EXPERTS))
    gate_b = 0.1 * n(ks[13], (1, NUM_EXPERTS))
    eu1 = n(ks[14], (NUM_EXPERTS, D_MODEL, RANK), 1.0 / math.sqrt(D_MODEL))
    ev1 = n(ks[15], (NUM_EXPERTS, RANK, D_FF), 1.0 / math.sqrt(RANK))
    eb1 = 0.1 * n(ks[16], (NUM_EXPERTS, 1, D_FF))
    eu2 = n(ks[17], (NUM_EXPERTS, D_FF, RANK), 1.0 / math.sqrt(D_FF))
    ev2 = n(ks[18], (NUM_EXPERTS, RANK, D_MODEL), 1.0 / math.sqrt(RANK))
    eb2 = 0.1 * n(ks[19], (NUM_EXPERTS, 1, D_MODEL))
    return (g1, b1, g2, b2, u_qkv, v_qkv, b_qkv, u_out, v_out, b_out,
            u_attn, v_attn, gate_w, gate_b, eu1, ev1, eb1, eu2, ev2, eb2)


if __name__ == "__main__":
    key = jax.random.PRNGKey(0)
    kx, kp = jax.random.split(key)
    x = jax.random.normal(kx, (BATCH, SEQ, D_MODEL), jnp.float32)
    params = init_params(kp)
    fused = fuse_params(params)
    w_blob, w2_blob, f_blob = pack_params(fused)

    out = jax.block_until_ready(transformer_block(x, w_blob, w2_blob, f_blob))
    ref = jax.block_until_ready(reference_block(x, fused))

    assert out.shape == (BATCH, SEQ, D_MODEL)
    max_err = float(jnp.max(jnp.abs(out - ref)))
    assert max_err < 2e-2, f"kernel/reference mismatch: max |diff| = {max_err}"
    print("KERNEL_OK")
</pallas_src>

<mosaic_0001>
module attributes {stable_mosaic.version = 11 : i64} {
  func.func @transformer_block_kernel(%arg0: i32, %arg1: memref<16x32xf32, #tpu.memory_space<vmem>>, %arg2: memref<32x512xbf16, #tpu.memory_space<vmem>>, %arg3: memref<256x32xbf16, #tpu.memory_space<vmem>>, %arg4: memref<112x256xf32, #tpu.memory_space<vmem>>, %arg5: memref<16x32xf32, #tpu.memory_space<vmem>>) attributes {dimension_semantics = [#tpu.dimension_semantics<arbitrary>], iteration_bounds = array<i64: 1>, scalar_prefetch = 0 : i64, scratch_operands = 0 : i64, tpu.core_type = #tpu.core_type<tc>, window_params = [{pipeline_mode = #tpu.pipeline_mode<synchronous>, transform_indices = @transform_0, window_bounds = array<i64: 16, 32>}, {pipeline_mode = #tpu.pipeline_mode<synchronous>, transform_indices = @transform_1, window_bounds = array<i64: 32, 512>}, {pipeline_mode = #tpu.pipeline_mode<synchronous>, transform_indices = @transform_2, window_bounds = array<i64: 256, 32>}, {pipeline_mode = #tpu.pipeline_mode<synchronous>, transform_indices = @transform_3, window_bounds = array<i64: 112, 256>}, {pipeline_mode = #tpu.pipeline_mode<synchronous>, transform_indices = @transform_4, window_bounds = array<i64: 16, 32>}]} {
    %c0 = arith.constant 0 : index
    %c0_0 = arith.constant 0 : index
    %0 = vector.load %arg1[%c0, %c0_0] : memref<16x32xf32, #tpu.memory_space<vmem>>, vector<16x32xf32>
    %c0_1 = arith.constant 0 : index
    %c0_2 = arith.constant 0 : index
    %1 = vector.load %arg4[%c0_1, %c0_2] : memref<112x256xf32, #tpu.memory_space<vmem>>, vector<1x32xf32>
    %c8 = arith.constant 8 : index
    %c0_3 = arith.constant 0 : index
    %2 = vector.load %arg4[%c8, %c0_3] : memref<112x256xf32, #tpu.memory_space<vmem>>, vector<1x32xf32>
    %cst = arith.constant dense<0.000000e+00> : vector<16xf32>
    %3 = vector.multi_reduction <add>, %0, %cst [1] : vector<16x32xf32> to vector<16xf32>
    %4 = vector.shape_cast %3 : vector<16xf32> to vector<16x1xf32>
    %cst_4 = arith.constant 3.200000e+01 : f32
    %5 = vector.broadcast %cst_4 : f32 to vector<16x1xf32>
    %6 = arith.divf %4, %5 : vector<16x1xf32>
    %7 = vector.broadcast %6 : vector<16x1xf32> to vector<16x32xf32>
    %8 = arith.subf %0, %7 : vector<16x32xf32>
    %9 = arith.mulf %8, %8 : vector<16x32xf32>
    %cst_5 = arith.constant dense<0.000000e+00> : vector<16xf32>
    %10 = vector.multi_reduction <add>, %9, %cst_5 [1] : vector<16x32xf32> to vector<16xf32>
    %11 = vector.shape_cast %10 : vector<16xf32> to vector<16x1xf32>
    %cst_6 = arith.constant 3.200000e+01 : f32
    %12 = vector.broadcast %cst_6 : f32 to vector<16x1xf32>
    %13 = arith.divf %11, %12 : vector<16x1xf32>
    %14 = vector.broadcast %6 : vector<16x1xf32> to vector<16x32xf32>
    %15 = arith.subf %0, %14 : vector<16x32xf32>
    %cst_7 = arith.constant 9.99999974E-6 : f32
    %16 = vector.broadcast %cst_7 : f32 to vector<16x1xf32>
    %17 = arith.addf %13, %16 : vector<16x1xf32>
    %18 = math.rsqrt %17 : vector<16x1xf32>
    %19 = vector.broadcast %18 : vector<16x1xf32> to vector<16x32xf32>
    %20 = arith.mulf %15, %19 : vector<16x32xf32>
    %21 = vector.broadcast %1 : vector<1x32xf32> to vector<16x32xf32>
    %22 = arith.mulf %20, %21 : vector<16x32xf32>
    %23 = vector.broadcast %2 : vector<1x32xf32> to vector<16x32xf32>
    %24 = arith.addf %22, %23 : vector<16x32xf32>
    %c0_8 = arith.constant 0 : index
    %c0_9 = arith.constant 0 : index
    %25 = vector.load %arg2[%c0_8, %c0_9] : memref<32x512xbf16, #tpu.memory_space<vmem>>, vector<32x96xbf16>
    %26 = arith.truncf %24 : vector<16x32xf32> to vector<16x32xbf16>
    %cst_10 = arith.constant dense<0.000000e+00> : vector<16x96xf32>
    %27 = tpu.matmul %26, %25, %cst_10 {dimension_numbers = #tpu.dot_dimension_numbers<[1], [0], [0], [1], [0, 0, 1, 1], [], []>} : vector<16x32xbf16>, vector<32x96xbf16>, vector<16x96xf32> -> vector<16x96xf32>
    %c32 = arith.constant 32 : index
    %c0_11 = arith.constant 0 : index
    %28 = vector.load %arg4[%c32, %c0_11] : memref<112x256xf32, #tpu.memory_space<vmem>>, vector<1x96xf32>
    %29 = vector.broadcast %28 : vector<1x96xf32> to vector<16x96xf32>
    %30 = arith.addf %27, %29 : vector<16x96xf32>
    %31 = vector.extract_strided_slice %30 {offsets = [0, 0], sizes = [16, 8], strides = [1, 1]} : vector<16x96xf32> to vector<16x8xf32>
    %32 = vector.extract_strided_slice %30 {offsets = [0, 8], sizes = [16, 8], strides = [1, 1]} : vector<16x96xf32> to vector<16x8xf32>
    %33 = vector.extract_strided_slice %30 {offsets = [0, 16], sizes = [16, 8], strides = [1, 1]} : vector<16x96xf32> to vector<16x8xf32>
    %34 = vector.extract_strided_slice %30 {offsets = [0, 24], sizes = [16, 8], strides = [1, 1]} : vector<16x96xf32> to vector<16x8xf32>
    %35 = tpu.concatenate %31, %32, %33, %34 in 0 : vector<16x8xf32>, vector<16x8xf32>, vector<16x8xf32>, vector<16x8xf32> -> vector<64x8xf32>
    %36 = vector.extract_strided_slice %30 {offsets = [0, 32], sizes = [16, 8], strides = [1, 1]} : vector<16x96xf32> to vector<16x8xf32>
    %37 = vector.extract_strided_slice %30 {offsets = [0, 40], sizes = [16, 8], strides = [1, 1]} : vector<16x96xf32> to vector<16x8xf32>
    %38 = vector.extract_strided_slice %30 {offsets = [0, 48], sizes = [16, 8], strides = [1, 1]} : vector<16x96xf32> to vector<16x8xf32>
    %39 = vector.extract_strided_slice %30 {offsets = [0, 56], sizes = [16, 8], strides = [1, 1]} : vector<16x96xf32> to vector<16x8xf32>
    %40 = tpu.concatenate %36, %37, %38, %39 in 0 : vector<16x8xf32>, vector<16x8xf32>, vector<16x8xf32>, vector<16x8xf32> -> vector<64x8xf32>
    %41 = vector.extract_strided_slice %30 {offsets = [0, 64], sizes = [16, 8], strides = [1, 1]} : vector<16x96xf32> to vector<16x8xf32>
    %42 = vector.extract_strided_slice %30 {offsets = [0, 72], sizes = [16, 8], strides = [1, 1]} : vector<16x96xf32> to vector<16x8xf32>
    %43 = vector.extract_strided_slice %30 {offsets = [0, 80], sizes = [16, 8], strides = [1, 1]} : vector<16x96xf32> to vector<16x8xf32>
    %44 = vector.extract_strided_slice %30 {offsets = [0, 88], sizes = [16, 8], strides = [1, 1]} : vector<16x96xf32> to vector<16x8xf32>
    %45 = tpu.concatenate %41, %42, %43, %44 in 0 : vector<16x8xf32>, vector<16x8xf32>, vector<16x8xf32>, vector<16x8xf32> -> vector<64x8xf32>
    %cst_12 = arith.constant dense<0.000000e+00> : vector<64x64xf32>
    %46 = tpu.matmul %35, %40, %cst_12 {dimension_numbers = #tpu.dot_dimension_numbers<[1], [1], [0], [0], [0, 0, 1, 0], [], []>} : vector<64x8xf32>, vector<64x8xf32>, vector<64x64xf32> -> vector<64x64xf32>
    %cst_13 = arith.constant 0.353553385 : f32
    %47 = vector.broadcast %cst_13 : f32 to vector<64x64xf32>
    %48 = arith.mulf %46, %47 : vector<64x64xf32>
    %49 = tpu.iota {dimensions = array<i32: 0>} : vector<64x64xi32>
    %50 = tpu.iota {dimensions = array<i32: 1>} : vector<64x64xi32>
    %c-8_i32 = arith.constant -8 : i32
    %51 = vector.broadcast %c-8_i32 : i32 to vector<64x64xi32>
    %52 = arith.andi %49, %51 : vector<64x64xi32>
    %c-8_i32_14 = arith.constant -8 : i32
    %53 = vector.broadcast %c-8_i32_14 : i32 to vector<64x64xi32>
    %54 = arith.andi %50, %53 : vector<64x64xi32>
    %55 = arith.cmpi eq, %52, %54 : vector<64x64xi32>
    %cst_15 = arith.constant -1.000000e+30 : f32
    %56 = vector.broadcast %cst_15 : f32 to vector<64x64xf32>
    %57 = arith.select %55, %48, %56 : vector<64x64xi1>, vector<64x64xf32>
    %cst_16 = arith.constant dense<0xFF800000> : vector<64xf32>
    %58 = vector.multi_reduction <maximumf>, %57, %cst_16 [1] : vector<64x64xf32> to vector<64xf32>
    %59 = vector.shape_cast %58 : vector<64xf32> to vector<64x1xf32>
    %60 = vector.broadcast %59 : vector<64x1xf32> to vector<64x64xf32>
    %61 = arith.subf %57, %60 : vector<64x64xf32>
    %62 = math.exp %61 : vector<64x64xf32>
    %cst_17 = arith.constant dense<0.000000e+00> : vector<64xf32>
    %63 = vector.multi_reduction <add>, %62, %cst_17 [1] : vector<64x64xf32> to vector<64xf32>
    %64 = vector.shape_cast %63 : vector<64xf32> to vector<64x1xf32>
    %65 = vector.broadcast %64 : vector<64x1xf32> to vector<64x64xf32>
    %66 = arith.divf %62, %65 : vector<64x64xf32>
    %cst_18 = arith.constant dense<0.000000e+00> : vector<64x8xf32>
    %67 = tpu.matmul %66, %45, %cst_18 {dimension_numbers = #tpu.dot_dimension_numbers<[1], [0], [0], [1], [0, 0, 1, 1], [], []>} : vector<64x64xf32>, vector<64x8xf32>, vector<64x8xf32> -> vector<64x8xf32>
    %68 = vector.extract_strided_slice %67 {offsets = [0, 0], sizes = [16, 8], strides = [1, 1]} : vector<64x8xf32> to vector<16x8xf32>
    %69 = vector.extract_strided_slice %67 {offsets = [16, 0], sizes = [16, 8], strides = [1, 1]} : vector<64x8xf32> to vector<16x8xf32>
    %70 = vector.extract_strided_slice %67 {offsets = [32, 0], sizes = [16, 8], strides = [1, 1]} : vector<64x8xf32> to vector<16x8xf32>
    %71 = vector.extract_strided_slice %67 {offsets = [48, 0], sizes = [16, 8], strides = [1, 1]} : vector<64x8xf32> to vector<16x8xf32>
    %72 = tpu.concatenate %68, %69, %70, %71 in 1 : vector<16x8xf32>, vector<16x8xf32>, vector<16x8xf32>, vector<16x8xf32> -> vector<16x32xf32>
    %c0_19 = arith.constant 0 : index
    %c128 = arith.constant 128 : index
    %73 = vector.load %arg2[%c0_19, %c128] : memref<32x512xbf16, #tpu.memory_space<vmem>>, vector<32x32xbf16>
    %74 = arith.truncf %72 : vector<16x32xf32> to vector<16x32xbf16>
    %cst_20 = arith.constant dense<0.000000e+00> : vector<16x32xf32>
    %75 = tpu.matmul %74, %73, %cst_20 {dimension_numbers = #tpu.dot_dimension_numbers<[1], [0], [0], [1], [0, 0, 1, 1], [], []>} : vector<16x32xbf16>, vector<32x32xbf16>, vector<16x32xf32> -> vector<16x32xf32>
    %c40 = arith.constant 40 : index
    %c0_21 = arith.constant 0 : index
    %76 = vector.load %arg4[%c40, %c0_21] : memref<112x256xf32, #tpu.memory_space<vmem>>, vector<1x32xf32>
    %77 = vector.broadcast %76 : vector<1x32xf32> to vector<16x32xf32>
    %78 = arith.addf %75, %77 : vector<16x32xf32>
    %79 = arith.addf %0, %78 : vector<16x32xf32>
    %c16 = arith.constant 16 : index
    %c0_22 = arith.constant 0 : index
    %80 = vector.load %arg4[%c16, %c0_22] : memref<112x256xf32, #tpu.memory_space<vmem>>, vector<1x32xf32>
    %c24 = arith.constant 24 : index
    %c0_23 = arith.constant 0 : index
    %81 = vector.load %arg4[%c24, %c0_23] : memref<112x256xf32, #tpu.memory_space<vmem>>, vector<1x32xf32>
    %cst_24 = arith.constant dense<0.000000e+00> : vector<16xf32>
    %82 = vector.multi_reduction <add>, %79, %cst_24 [1] : vector<16x32xf32> to vector<16xf32>
    %83 = vector.shape_cast %82 : vector<16xf32> to vector<16x1xf32>
    %cst_25 = arith.constant 3.200000e+01 : f32
    %84 = vector.broadcast %cst_25 : f32 to vector<16x1xf32>
    %85 = arith.divf %83, %84 : vector<16x1xf32>
    %86 = vector.broadcast %85 : vector<16x1xf32> to vector<16x32xf32>
    %87 = arith.subf %79, %86 : vector<16x32xf32>
    %88 = arith.mulf %87, %87 : vector<16x32xf32>
    %cst_26 = arith.constant dense<0.000000e+00> : vector<16xf32>
    %89 = vector.multi_reduction <add>, %88, %cst_26 [1] : vector<16x32xf32> to vector<16xf32>
    %90 = vector.shape_cast %89 : vector<16xf32> to vector<16x1xf32>
    %cst_27 = arith.constant 3.200000e+01 : f32
    %91 = vector.broadcast %cst_27 : f32 to vector<16x1xf32>
    %92 = arith.divf %90, %91 : vector<16x1xf32>
    %93 = vector.broadcast %85 : vector<16x1xf32> to vector<16x32xf32>
    %94 = arith.subf %79, %93 : vector<16x32xf32>
    %cst_28 = arith.constant 9.99999974E-6 : f32
    %95 = vector.broadcast %cst_28 : f32 to vector<16x1xf32>
    %96 = arith.addf %92, %95 : vector<16x1xf32>
    %97 = math.rsqrt %96 : vector<16x1xf32>
    %98 = vector.broadcast %97 : vector<16x1xf32> to vector<16x32xf32>
    %99 = arith.mulf %94, %98 : vector<16x32xf32>
    %100 = vector.broadcast %80 : vector<1x32xf32> to vector<16x32xf32>
    %101 = arith.mulf %99, %100 : vector<16x32xf32>
    %102 = vector.broadcast %81 : vector<1x32xf32> to vector<16x32xf32>
    %103 = arith.addf %101, %102 : vector<16x32xf32>
    %c64 = arith.constant 64 : index
    %c0_29 = arith.constant 0 : index
    %104 = vector.load %arg4[%c64, %c0_29] : memref<112x256xf32, #tpu.memory_space<vmem>>, vector<32x4xf32>
    %cst_30 = arith.constant dense<0.000000e+00> : vector<16x4xf32>
    %105 = tpu.matmul %103, %104, %cst_30 {dimension_numbers = #tpu.dot_dimension_numbers<[1], [0], [0], [1], [0, 0, 1, 1], [], []>} : vector<16x32xf32>, vector<32x4xf32>, vector<16x4xf32> -> vector<16x4xf32>
    %c48 = arith.constant 48 : index
    %c0_31 = arith.constant 0 : index
    %106 = vector.load %arg4[%c48, %c0_31] : memref<112x256xf32, #tpu.memory_space<vmem>>, vector<1x4xf32>
    %107 = vector.broadcast %106 : vector<1x4xf32> to vector<16x4xf32>
    %108 = arith.addf %105, %107 : vector<16x4xf32>
    %cst_32 = arith.constant dense<0xFF800000> : vector<16xf32>
    %109 = vector.multi_reduction <maximumf>, %108, %cst_32 [1] : vector<16x4xf32> to vector<16xf32>
    %110 = vector.shape_cast %109 : vector<16xf32> to vector<16x1xf32>
    %111 = vector.broadcast %110 : vector<16x1xf32> to vector<16x4xf32>
    %112 = arith.subf %108, %111 : vector<16x4xf32>
    %113 = math.exp %112 : vector<16x4xf32>
    %cst_33 = arith.constant dense<0.000000e+00> : vector<16xf32>
    %114 = vector.multi_reduction <add>, %113, %cst_33 [1] : vector<16x4xf32> to vector<16xf32>
    %115 = vector.shape_cast %114 : vector<16xf32> to vector<16x1xf32>
    %116 = vector.broadcast %115 : vector<16x1xf32> to vector<16x4xf32>
    %117 = arith.divf %113, %116 : vector<16x4xf32>
    %118 = tpu.iota {dimensions = array<i32: 1>} : vector<16x4xi32>
    %119 = arith.sitofp %118 : vector<16x4xi32> to vector<16x4xf32>
    %cst_34 = arith.constant dense<0xFF800000> : vector<16xf32>
    %120 = vector.multi_reduction <maximumf>, %117, %cst_34 [1] : vector<16x4xf32> to vector<16xf32>
    %121 = vector.shape_cast %120 : vector<16xf32> to vector<16x1xf32>
    %122 = vector.broadcast %121 : vector<16x1xf32> to vector<16x4xf32>
    %123 = arith.cmpf oge, %117, %122 : vector<16x4xf32>
    %cst_35 = arith.constant 4.000000e+00 : f32
    %124 = vector.broadcast %cst_35 : f32 to vector<16x4xf32>
    %125 = arith.select %123, %119, %124 : vector<16x4xi1>, vector<16x4xf32>
    %cst_36 = arith.constant dense<0x7F800000> : vector<16xf32>
    %126 = vector.multi_reduction <minimumf>, %125, %cst_36 [1] : vector<16x4xf32> to vector<16xf32>
    %127 = vector.shape_cast %126 : vector<16xf32> to vector<16x1xf32>
    %128 = vector.broadcast %127 : vector<16x1xf32> to vector<16x4xf32>
    %129 = arith.cmpf oeq, %119, %128 : vector<16x4xf32>
    %cst_37 = arith.constant -1.000000e+00 : f32
    %130 = vector.broadcast %cst_37 : f32 to vector<16x4xf32>
    %131 = arith.select %129, %130, %117 : vector<16x4xi1>, vector<16x4xf32>
    %cst_38 = arith.constant dense<0xFF800000> : vector<16xf32>
    %132 = vector.multi_reduction <maximumf>, %131, %cst_38 [1] : vector<16x4xf32> to vector<16xf32>
    %133 = vector.shape_cast %132 : vector<16xf32> to vector<16x1xf32>
    %134 = vector.broadcast %133 : vector<16x1xf32> to vector<16x4xf32>
    %135 = arith.cmpf oge, %131, %134 : vector<16x4xf32>
    %cst_39 = arith.constant 4.000000e+00 : f32
    %136 = vector.broadcast %cst_39 : f32 to vector<16x4xf32>
    %137 = arith.select %135, %119, %136 : vector<16x4xi1>, vector<16x4xf32>
    %cst_40 = arith.constant dense<0x7F800000> : vector<16xf32>
    %138 = vector.multi_reduction <minimumf>, %137, %cst_40 [1] : vector<16x4xf32> to vector<16xf32>
    %139 = vector.shape_cast %138 : vector<16xf32> to vector<16x1xf32>
    %140 = vector.broadcast %139 : vector<16x1xf32> to vector<16x4xf32>
    %141 = arith.cmpf oeq, %119, %140 : vector<16x4xf32>
    %cst_41 = arith.constant 0.000000e+00 : f32
    %142 = vector.shape_cast %121 : vector<16x1xf32> to vector<16x1xf32>
    %143 = vector.broadcast %142 : vector<16x1xf32> to vector<16x4xf32>
    %144 = vector.broadcast %cst_41 : f32 to vector<16x4xf32>
    %145 = arith.select %129, %143, %144 : vector<16x4xi1>, vector<16x4xf32>
    %cst_42 = arith.constant 0.000000e+00 : f32
    %146 = vector.shape_cast %133 : vector<16x1xf32> to vector<16x1xf32>
    %147 = vector.broadcast %146 : vector<16x1xf32> to vector<16x4xf32>
    %148 = vector.broadcast %cst_42 : f32 to vector<16x4xf32>
    %149 = arith.select %141, %147, %148 : vector<16x4xi1>, vector<16x4xf32>
    %150 = arith.addf %145, %149 : vector<16x4xf32>
    %151 = arith.addf %121, %133 : vector<16x1xf32>
    %152 = vector.broadcast %151 : vector<16x1xf32> to vector<16x4xf32>
    %153 = arith.divf %150, %152 : vector<16x4xf32>
    %c0_43 = arith.constant 0 : index
    %c256 = arith.constant 256 : index
    %154 = vector.load %arg2[%c0_43, %c256] : memref<32x512xbf16, #tpu.memory_space<vmem>>, vector<32x256xbf16>
    %155 = arith.truncf %103 : vector<16x32xf32> to vector<16x32xbf16>
    %cst_44 = arith.constant dense<0.000000e+00> : vector<16x256xf32>
    %156 = tpu.matmul %155, %154, %cst_44 {dimension_numbers = #tpu.dot_dimension_numbers<[1], [0], [0], [1], [0, 0, 1, 1], [], []>} : vector<16x32xbf16>, vector<32x256xbf16>, vector<16x256xf32> -> vector<16x256xf32>
    %c56 = arith.constant 56 : index
    %c0_45 = arith.constant 0 : index
    %157 = vector.load %arg4[%c56, %c0_45] : memref<112x256xf32, #tpu.memory_space<vmem>>, vector<1x256xf32>
    %158 = vector.broadcast %157 : vector<1x256xf32> to vector<16x256xf32>
    %159 = arith.addf %156, %158 : vector<16x256xf32>
    %cst_46 = arith.constant 0.000000e+00 : f32
    %160 = vector.broadcast %cst_46 : f32 to vector<16x256xf32>
    %161 = arith.maximumf %159, %160 : vector<16x256xf32>
    %c96 = arith.constant 96 : index
    %c0_47 = arith.constant 0 : index
    %162 = vector.load %arg4[%c96, %c0_47] : memref<112x256xf32, #tpu.memory_space<vmem>>, vector<4x256xf32>
    %cst_48 = arith.constant dense<0.000000e+00> : vector<16x256xf32>
    %163 = tpu.matmul %153, %162, %cst_48 {dimension_numbers = #tpu.dot_dimension_numbers<[1], [0], [0], [1], [0, 0, 1, 1], [], []>} : vector<16x4xf32>, vector<4x256xf32>, vector<16x256xf32> -> vector<16x256xf32>
    %164 = arith.mulf %161, %163 : vector<16x256xf32>
    %c0_49 = arith.constant 0 : index
    %c0_50 = arith.constant 0 : index
    %165 = vector.load %arg3[%c0_49, %c0_50] : memref<256x32xbf16, #tpu.memory_space<vmem>>, vector<256x32xbf16>
    %166 = arith.truncf %164 : vector<16x256xf32> to vector<16x256xbf16>
    %cst_51 = arith.constant dense<0.000000e+00> : vector<16x32xf32>
    %167 = tpu.matmul %166, %165, %cst_51 {dimension_numbers = #tpu.dot_dimension_numbers<[1], [0], [0], [1], [0, 0, 1, 1], [], []>} : vector<16x256xbf16>, vector<256x32xbf16>, vector<16x32xf32> -> vector<16x32xf32>
    %c104 = arith.constant 104 : index
    %c0_52 = arith.constant 0 : index
    %168 = vector.load %arg4[%c104, %c0_52] : memref<112x256xf32, #tpu.memory_space<vmem>>, vector<4x32xf32>
    %cst_53 = arith.constant dense<0.000000e+00> : vector<16x32xf32>
    %169 = tpu.matmul %153, %168, %cst_53 {dimension_numbers = #tpu.dot_dimension_numbers<[1], [0], [0], [1], [0, 0, 1, 1], [], []>} : vector<16x4xf32>, vector<4x32xf32>, vector<16x32xf32> -> vector<16x32xf32>
    %170 = arith.addf %167, %169 : vector<16x32xf32>
    %171 = arith.addf %79, %170 : vector<16x32xf32>
    %c0_54 = arith.constant 0 : index
    %c0_55 = arith.constant 0 : index
    %172 = vector.load %arg5[%c0_54, %c0_55] : memref<16x32xf32, #tpu.memory_space<vmem>>, vector<16x32xf32>
    tpu.vector_store %arg5[%c0_54, %c0_55], %171 {strides = array<i32>} : memref<16x32xf32, #tpu.memory_space<vmem>>, vector<16x32xf32>,
    return
  }
  func.func @transform_0(%arg0: i32) -> (i32, i32) {
    %c0_i32 = arith.constant 0 : i32
    %c0_i32_0 = arith.constant 0 : i32
    %c0_i32_1 = arith.constant 0 : i32
    return %c0_i32, %c0_i32_0 : i32, i32
  }
  func.func @transform_1(%arg0: i32) -> (i32, i32) {
    %c0_i32 = arith.constant 0 : i32
    %c0_i32_0 = arith.constant 0 : i32
    %c0_i32_1 = arith.constant 0 : i32
    return %c0_i32, %c0_i32_0 : i32, i32
  }
  func.func @transform_2(%arg0: i32) -> (i32, i32) {
    %c0_i32 = arith.constant 0 : i32
    %c0_i32_0 = arith.constant 0 : i32
    %c0_i32_1 = arith.constant 0 : i32
    return %c0_i32, %c0_i32_0 : i32, i32
  }
  func.func @transform_3(%arg0: i32) -> (i32, i32) {
    %c0_i32 = arith.constant 0 : i32
    %c0_i32_0 = arith.constant 0 : i32
    %c0_i32_1 = arith.constant 0 : i32
    return %c0_i32, %c0_i32_0 : i32, i32
  }
  func.func @transform_4(%arg0: i32) -> (i32, i32) {
    %c0_i32 = arith.constant 0 : i32
    %c0_i32_0 = arith.constant 0 : i32
    %c0_i32_1 = arith.constant 0 : i32
    return %c0_i32, %c0_i32_0 : i32, i32
  }
}

</mosaic_0001>

<llo_original>
// kernel: tpu_custom_call.1
$region0: #{tpu_custom_call.1}
  #allocation0 [shape = 'u32[]', space=smem, size = 0x4, offset = 0x4, fixed_abs, tag = 'smem constant byte address 0x4 - core index']
  #allocation1 [shape = 'u32[144,128]{1,0:T(1,128)}', space=vmem, size = 0x12000, scoped, tag = 'internal scratch']
  %s0 = inlined_call_operand.vmem [shape: f32[16,32], index: 0, kind: input, shape index: {}]
  %s1 = inlined_call_operand.vmem [shape: bf16[32,512], index: 1, kind: input, shape index: {}]
  %s2 = inlined_call_operand.vmem [shape: bf16[256,32], index: 2, kind: input, shape index: {}]
  %s3 = inlined_call_operand.hbm [shape: f32[112,256], index: 3, kind: input, shape index: {}]
  %s4 = inlined_call_operand.hbm [shape: f32[16,32], index: 4, kind: output, shape index: {}]
  %s5 = sld [smem:[#allocation0]]
  $region30: #{tpu_custom_call.1} parent=0
    _
  %s7 = ssub.s32 1, %s5
  %s8 = scalar_select 0, %s7, %s5
  $region1: #{tpu_custom_call.1} parent=0
    #allocation2 [shape = 'u8[114688]{0}', space=vmem, size = 0x1c000, scoped, tag = 'input window, operand 3, single buffered']
    #allocation3 [shape = 's32[1]{0}', space=sflag, size = 0x4, scoped, tag = 'scoped memory for tpu_custom_call.1']
    #allocation4 [shape = 's32[1]{0}', space=sflag, size = 0x4, scoped, tag = 'scoped memory for tpu_custom_call.1']
    #allocation5 [shape = 'u8[8192]{0}', space=vmem, size = 0x2000, scoped, tag = 'output window, operand 0, single buffered']
    %9 = vsyncpa [#allocation3], 0
    %10 = vsyncpa [#allocation4], 0
    // Predicated region
    $region2: #{tpu_custom_call.1} parent=1 // pred_check
      _
    $region3: #{tpu_custom_call.1} parent=1 // pred_check_branch
      %12 = sbr.rel (0) target = $region5
    $region4: #{tpu_custom_call.1} parent=1 // pred_region
      _
    $region5: #{tpu_custom_call.1} parent=1 // pred_fallthru
      _
    // Predicated region
    $region6: #{tpu_custom_call.1} parent=1 // pred_check
      _
    $region7: #{tpu_custom_call.1} parent=1 // pred_check_branch
      %14 = sbr.rel (0) target = $region9
    $region8: #{tpu_custom_call.1} parent=1 // pred_region
      _
    $region9: #{tpu_custom_call.1} parent=1 // pred_fallthru
      _
    // Predicated region
    $region10: #{tpu_custom_call.1} parent=1 // pred_check
      _
    $region11: #{tpu_custom_call.1} parent=1 // pred_check_branch
      %16 = sbr.rel (0) target = $region13
    $region12: #{tpu_custom_call.1} parent=1 // pred_region
      _
    $region13: #{tpu_custom_call.1} parent=1 // pred_fallthru
      _
    // Predicated region
    $region14: #{tpu_custom_call.1} parent=1 // pred_check
      _
    $region15: #{tpu_custom_call.1} parent=1 // pred_check_branch
      %18 = sbr.rel (0) target = $region17
    $region16: #{tpu_custom_call.1} parent=1 // pred_region
      %s20 = ssub.s32 3584, 3584
      %21 = vsyncadd [#allocation3], %s20
      %s22 = sshll.u32 [#allocation2], 4
      %s23 = int_to_ptr.vmem [resolvable:$true] %s22
      %28 = dma.hbm_to_vmem [thread:$0]  %s3, 3584, %s23, [#allocation3], 256, 256, 16
    $region17: #{tpu_custom_call.1} parent=1 // pred_fallthru
      _
    // Predicated region
    $region18: #{tpu_custom_call.1} parent=1 // pred_check
      _
    $region19: #{tpu_custom_call.1} parent=1 // pred_check_branch
      %30 = sbr.rel (0) target = $region21
    $region20: #{tpu_custom_call.1} parent=1 // pred_region
      %31 = dma.done [#allocation3], 3584
    $region21: #{tpu_custom_call.1} parent=1 // pred_fallthru
      _
    %v33 = vld [vmem:[%s0] sm:$0xff]
    %v34 = vld [vmem:[%s0 + $0x8] sm:$0xff]
    %v35 = vld [vmem:[#allocation2] ss:$0 sm:$0xff]
    %v36 = vld [vmem:[#allocation2 + $0x10] ss:$0 sm:$0xff]
    %vm37 = vcmask 261120
    %v38 = vsel %vm37, %v33, 0.0
    %39 = vadd.xlane.f32.xlu0 %v38
    %v40 = vpop.xlane.xlu0 %39
    %v41 = vsel %vm37, %v34, 0.0
    %42 = vadd.xlane.f32.xlu0 %v41
    %v43 = vpop.xlane.xlu0 %42
    %v44 = vrcp.pop 32.0
    %v45 = vmul.f32 %v40, %v44
    %v46 = vmul.f32 %v43, %v44
    %v47 = vsub.f32 %v33, %v45
    %v48 = vsub.f32 %v34, %v46
    %v49 = vmul.f32 %v47, %v47
    %v50 = vmul.f32 %v48, %v48
    %v51 = vsel %vm37, %v49, 0.0
    %52 = vadd.xlane.f32.xlu0 %v51
    %v53 = vpop.xlane.xlu0 %52
    %v54 = vsel %vm37, %v50, 0.0
    %55 = vadd.xlane.f32.xlu0 %v54
    %v56 = vpop.xlane.xlu0 %55
    %v57 = vmul.f32 %v53, %v44
    %v58 = vmul.f32 %v56, %v44
    %v59 = vadd.f32 %v57, 1e-05
    %v60 = vadd.f32 %v58, 1e-05
    %v61 = vrsqrt.pop %v59
    %v62 = vrsqrt.pop %v60
    %v63 = vmul.f32 %v47, %v61
    %v64 = vmul.f32 %v48, %v62
    %v65 = vmul.f32 %v63, %v35
    %v66 = vmul.f32 %v64, %v35
    %v67 = vadd.f32 %v65, %v36
    %v68 = vadd.f32 %v66, %v36
    %v69 = vld [vmem:[%s1] sm:$0xf]
    %v70 = vld [vmem:[%s1 + $0x10] sm:$0xf]
    %v71 = vld [vmem:[%s1 + $0x20] sm:$0xf]
    %v72 = vld [vmem:[%s1 + $0x30] sm:$0xf]
    %v73 = vpack.c.bf16 %v68, %v67
    %v74 = vld [vmem:[#allocation2 + $0x40] ss:$0 sm:$0xff]
    %v79 = vunpack.c.l.b16 %v69
    %v80 = vunpack.c.l.b16 %v70
    %v81 = vunpack.c.l.b16 %v71
    %v82 = vunpack.c.l.b16 %v72
    %v83 = vpack.c.b16 %v80, %v79
    %v84 = vpack.c.b16 %v82, %v81
    %v88 = vsel %vm37, %v73, 0
    %90 = vmatprep.subr.bf16.mxu0 0
    %91 = vmatpush1.bf16.msra.mxu0 %v83
    %92 = vmatprep.subr.bf16.mxu0 0
    %93 = vmatpush1.bf16.msra.mxu0 %v84
    %94 = vmatprep.subr.bf16.mxu0 0
    %95 = vmatpush1.bf16.msra.mxu0 0
    %96 = vmatprep.subr.bf16.mxu0 0
    %97 = vmatpush1.bf16.msra.mxu0 0
    %98 = vmatprep.subr.bf16.mxu0 0
    %99 = vmatpush1.bf16.msra.mxu0 0
    %100 = vmatprep.subr.bf16.mxu0 0
    %101 = vmatpush1.bf16.msra.mxu0 0
    %102 = vmatprep.subr.bf16.mxu0 0
    %103 = vmatpush1.bf16.msra.mxu0 0
    %104 = vmatprep.subr.bf16.mxu0 0
    %105 = vmatpush1.bf16.msra.mxu0 0
    %106 = vmatprep.subr.bf16.mxu0 0
    %107 = vmatpush1.bf16.msra.mxu0 0
    %108 = vmatprep.subr.bf16.mxu0 0
    %109 = vmatpush1.bf16.msra.mxu0 0
    %110 = vmatprep.subr.bf16.mxu0 0
    %111 = vmatpush1.bf16.msra.mxu0 0
    %112 = vmatprep.subr.bf16.mxu0 0
    %113 = vmatpush1.bf16.msra.mxu0 0
    %114 = vmatprep.subr.bf16.mxu0 0
    %115 = vmatpush1.bf16.msra.mxu0 0
    %116 = vmatprep.subr.bf16.mxu0 0
    %117 = vmatpush1.bf16.msra.mxu0 0
    %118 = vmatprep.subr.bf16.mxu0 0
    %119 = vmatpush1.bf16.msra.mxu0 0
    %120 = vmatprep.subr.bf16.mxu0 0
    %121 = vmatpush1.bf16.msra.mxu0 0
    %122 = vmatprep.mubr.bf16.mxu0 0
    %123 = vmatmul.mubr.bf16.gmra.mrb[0].mxu0 %v88
    %v124 = vpop.f32.mrb[0].mxu0
    %v125 = vadd.f32 %v74, %v124
    %v126 = vpop.f32.mrb[0].mxu0
    %v127 = vpop.f32.mrb[0].mxu0
    %v128 = vadd.f32 %v74, %v127
    %v129 = vpop.f32.mrb[0].mxu0
    %130 = vdwg.mxu0
    %133 = vrot.lane.b32.xlu0 %v125, 120
    %v134 = vpop.permute.xlu0 %133
    %135 = vrot.lane.b32.xlu0 %v128, 120
    %v136 = vpop.permute.xlu0 %135
    %137 = vrot.lane.b32.xlu0 %v125, 112
    %v138 = vpop.permute.xlu0 %137
    %139 = vrot.lane.b32.xlu0 %v128, 112
    %v140 = vpop.permute.xlu0 %139
    %141 = vrot.lane.b32.xlu0 %v125, 104
    %v142 = vpop.permute.xlu0 %141
    %143 = vrot.lane.b32.xlu0 %v128, 104
    %v144 = vpop.permute.xlu0 %143
    %145 = vrot.lane.b32.xlu0 %v125, 96
    %v146 = vpop.permute.xlu0 %145
    %147 = vrot.lane.b32.xlu0 %v128, 96
    %v148 = vpop.permute.xlu0 %147
    %149 = vrot.lane.b32.xlu0 %v134, 96
    %v150 = vpop.permute.xlu0 %149
    %151 = vrot.lane.b32.xlu0 %v136, 96
    %v152 = vpop.permute.xlu0 %151
    %153 = vrot.lane.b32.xlu0 %v138, 96
    %v154 = vpop.permute.xlu0 %153
    %155 = vrot.lane.b32.xlu0 %v140, 96
    %v156 = vpop.permute.xlu0 %155
    %157 = vrot.lane.b32.xlu0 %v142, 96
    %v158 = vpop.permute.xlu0 %157
    %159 = vrot.lane.b32.xlu0 %v144, 96
    %v160 = vpop.permute.xlu0 %159
    %vm161 = vcmask 64512
    %v162 = vsel %vm161, %v125, 0
    %v164 = vsel %vm161, %v128, 0
    %v166 = vsel %vm161, %v134, 0
    %v168 = vsel %vm161, %v136, 0
    %v170 = vsel %vm161, %v138, 0
    %v172 = vsel %vm161, %v140, 0
    %v174 = vsel %vm161, %v142, 0
    %v176 = vsel %vm161, %v144, 0
    %v178 = vsel %vm161, %v146, 0
    %v180 = vsel %vm161, %v148, 0
    %v182 = vsel %vm161, %v150, 0
    %v184 = vsel %vm161, %v152, 0
    %v186 = vsel %vm161, %v154, 0
    %v188 = vsel %vm161, %v156, 0
    %v190 = vsel %vm161, %v158, 0
    %v192 = vsel %vm161, %v160, 0
    %194 = vmatprep.subr.mxu0 0.0
    %195 = vmatpush1.xpose.msra.mxu0 %v178
    %196 = vmatprep.subr.mxu0 0.0
    %197 = vmatpush1.xpose.msra.mxu0 %v180
    %198 = vmatprep.subr.mxu0 0.0
    %199 = vmatpush1.xpose.msra.mxu0 %v182
    %200 = vmatprep.subr.mxu0 0.0
    %201 = vmatpush1.xpose.msra.mxu0 %v184
    %202 = vmatprep.subr.mxu0 0.0
    %203 = vmatpush1.xpose.msra.mxu0 %v186
    %204 = vmatprep.subr.mxu0 0.0
    %205 = vmatpush1.xpose.msra.mxu0 %v188
    %206 = vmatprep.subr.mxu0 0.0
    %207 = vmatpush1.xpose.msra.mxu0 %v190
    %208 = vmatprep.subr.mxu0 0.0
    %209 = vmatpush1.xpose.msra.mxu0 %v192
    %210 = vmatprep.subr.mxu0 0.0
    %211 = vmatpush1.xpose.msra.mxu0 0.0
    %212 = vmatprep.subr.mxu0 0.0
    %213 = vmatpush1.xpose.msra.mxu0 0.0
    %214 = vmatprep.subr.mxu0 0.0
    %215 = vmatpush1.xpose.msra.mxu0 0.0
    %216 = vmatprep.subr.mxu0 0.0
    %217 = vmatpush1.xpose.msra.mxu0 0.0
    %218 = vmatprep.subr.mxu0 0.0
    %219 = vmatpush1.xpose.msra.mxu0 0.0
    %220 = vmatprep.subr.mxu0 0.0
    %221 = vmatpush1.xpose.msra.mxu0 0.0
    %222 = vmatprep.subr.mxu0 0.0
    %223 = vmatpush1.xpose.msra.mxu0 0.0
    %224 = vmatprep.subr.mxu0 0.0
    %225 = vmatpush1.xpose.msra.mxu0 0.0
    %226 = vmatprep.subr.mxu0 0.0
    %227 = vmatpush1.xpose.msra.mxu0 0.0
    %228 = vmatprep.subr.mxu0 0.0
    %229 = vmatpush1.xpose.msra.mxu0 0.0
    %230 = vmatprep.subr.mxu0 0.0
    %231 = vmatpush1.xpose.msra.mxu0 0.0
    %232 = vmatprep.subr.mxu0 0.0
    %233 = vmatpush1.xpose.msra.mxu0 0.0
    %234 = vmatprep.subr.mxu0 0.0
    %235 = vmatpush1.xpose.msra.mxu0 0.0
    %236 = vmatprep.subr.mxu0 0.0
    %237 = vmatpush1.xpose.msra.mxu0 0.0
    %238 = vmatprep.subr.mxu0 0.0
    %239 = vmatpush1.xpose.msra.mxu0 0.0
    %240 = vmatprep.subr.mxu0 0.0
    %241 = vmatpush1.xpose.msra.mxu0 0.0
    %242 = vmatprep.subr.mxu0 0.0
    %243 = vmatpush1.xpose.msra.mxu0 0.0
    %244 = vmatprep.subr.mxu0 0.0
    %245 = vmatpush1.xpose.msra.mxu0 0.0
    %246 = vmatprep.subr.mxu0 0.0
    %247 = vmatpush1.xpose.msra.mxu0 0.0
    %248 = vmatprep.subr.mxu0 0.0
    %249 = vmatpush1.xpose.msra.mxu0 0.0
    %250 = vmatprep.subr.mxu0 0.0
    %251 = vmatpush1.xpose.msra.mxu0 0.0
    %252 = vmatprep.subr.mxu0 0.0
    %253 = vmatpush1.xpose.msra.mxu0 0.0
    %254 = vmatprep.subr.mxu0 0.0
    %255 = vmatpush1.xpose.msra.mxu0 0.0
    %256 = vmatprep.subr.mxu0 0.0
    %257 = vmatpush1.xpose.msra.mxu0 0.0
    %258 = vmatprep.mubr.f32.mxu0 0.0
    %259 = vmatmul.mubr.f32.gmra.mrb[0].mxu0 %v162
    %v260 = vpop.f32.mrb[0].mxu0
    %v261 = vadd.f32 0.0, %v260
    %v262 = vpop.f32.mrb[0].mxu0
    %263 = vmatprep.mubr.f32.mxu0 0.0
    %264 = vmatmul.mubr.f32.gmra.mrb[0].mxu0 %v164
    %v265 = vpop.f32.mrb[0].mxu0
    %v266 = vadd.f32 0.0, %v265
    %v267 = vpop.f32.mrb[0].mxu0
    %268 = vmatprep.mubr.f32.mxu0 0.0
    %269 = vmatmul.mubr.f32.gmra.mrb[0].mxu0 %v166
    %v270 = vpop.f32.mrb[0].mxu0
    %v271 = vadd.f32 0.0, %v270
    %v272 = vpop.f32.mrb[0].mxu0
    %273 = vmatprep.mubr.f32.mxu0 0.0
    %274 = vmatmul.mubr.f32.gmra.mrb[0].mxu0 %v168
    %v275 = vpop.f32.mrb[0].mxu0
    %v276 = vadd.f32 0.0, %v275
    %v277 = vpop.f32.mrb[0].mxu0
    %278 = vmatprep.mubr.f32.mxu0 0.0
    %279 = vmatmul.mubr.f32.gmra.mrb[0].mxu0 %v170
    %v280 = vpop.f32.mrb[0].mxu0
    %v281 = vadd.f32 0.0, %v280
    %v282 = vpop.f32.mrb[0].mxu0
    %283 = vmatprep.mubr.f32.mxu0 0.0
    %284 = vmatmul.mubr.f32.gmra.mrb[0].mxu0 %v172
    %v285 = vpop.f32.mrb[0].mxu0
    %v286 = vadd.f32 0.0, %v285
    %v287 = vpop.f32.mrb[0].mxu0
    %288 = vmatprep.mubr.f32.mxu0 0.0
    %289 = vmatmul.mubr.f32.gmra.mrb[0].mxu0 %v174
    %v290 = vpop.f32.mrb[0].mxu0
    %v291 = vadd.f32 0.0, %v290
    %v292 = vpop.f32.mrb[0].mxu0
    %293 = vmatprep.mubr.f32.mxu0 0.0
    %294 = vmatmul.mubr.f32.gmra.mrb[0].mxu0 %v176
    %v295 = vpop.f32.mrb[0].mxu0
    %v296 = vadd.f32 0.0, %v295
    %v297 = vpop.f32.mrb[0].mxu0
    %298 = vdwg.mxu0
    %v299 = vmul.f32 %v261, 0.35355338
    %v300 = vmul.f32 %v266, 0.35355338
    %v301 = vmul.f32 %v271, 0.35355338
    %v302 = vmul.f32 %v276, 0.35355338
    %v303 = vmul.f32 %v281, 0.35355338
    %v304 = vmul.f32 %v286, 0.35355338
    %v305 = vmul.f32 %v291, 0.35355338
    %v306 = vmul.f32 %v296, 0.35355338
    %v307 = vlaneseq
    %v308 = vshrl.u32 %v307, 7
    %v309 = vadd.s32 %v308, 8
    %v310 = vadd.s32 %v308, 16
    %v311 = vadd.s32 %v308, 24
    %v312 = vadd.s32 %v308, 32
    %v313 = vadd.s32 %v308, 40
    %v314 = vadd.s32 %v308, 48
    %v315 = vadd.s32 %v308, 56
    %v316 = vlaneseq
    %v317 = vand.u32 %v316, 127
    %v318 = vand.u32 %v308, 4294967288
    %v319 = vand.u32 %v309, 4294967288
    %v320 = vand.u32 %v310, 4294967288
    %v321 = vand.u32 %v311, 4294967288
    %v322 = vand.u32 %v312, 4294967288
    %v323 = vand.u32 %v313, 4294967288
    %v324 = vand.u32 %v314, 4294967288
    %v325 = vand.u32 %v315, 4294967288
    %v326 = vand.u32 %v317, 4294967288
    %vm327 = vcmp.eq.s32.totalorder %v318, %v326
    %vm328 = vcmp.eq.s32.totalorder %v319, %v326
    %vm329 = vcmp.eq.s32.totalorder %v320, %v326
    %vm330 = vcmp.eq.s32.totalorder %v321, %v326
    %vm331 = vcmp.eq.s32.totalorder %v322, %v326
    %vm332 = vcmp.eq.s32.totalorder %v323, %v326
    %vm333 = vcmp.eq.s32.totalorder %v324, %v326
    %vm334 = vcmp.eq.s32.totalorder %v325, %v326
    %v335 = vsel %vm327, %v299, -1e+30
    %v336 = vsel %vm328, %v300, -1e+30
    %v337 = vsel %vm329, %v301, -1e+30
    %v338 = vsel %vm330, %v302, -1e+30
    %v339 = vsel %vm331, %v303, -1e+30
    %v340 = vsel %vm332, %v304, -1e+30
    %v341 = vsel %vm333, %v305, -1e+30
    %v342 = vsel %vm334, %v306, -1e+30
    %vm343 = vcmask 523264
    %v344 = vsel %vm343, %v335, -inf
    %345 = vmax.xlane.f32.xlu0 %v344
    %v346 = vpop.xlane.xlu0 %345
    %v347 = vsel %vm343, %v336, -inf
    %348 = vmax.xlane.f32.xlu0 %v347
    %v349 = vpop.xlane.xlu0 %348
    %v350 = vsel %vm343, %v337, -inf
    %351 = vmax.xlane.f32.xlu0 %v350
    %v352 = vpop.xlane.xlu0 %351
    %v353 = vsel %vm343, %v338, -inf
    %354 = vmax.xlane.f32.xlu0 %v353
    %v355 = vpop.xlane.xlu0 %354
    %v356 = vsel %vm343, %v339, -inf
    %357 = vmax.xlane.f32.xlu0 %v356
    %v358 = vpop.xlane.xlu0 %357
    %v359 = vsel %vm343, %v340, -inf
    %360 = vmax.xlane.f32.xlu0 %v359
    %v361 = vpop.xlane.xlu0 %360
    %v362 = vsel %vm343, %v341, -inf
    %363 = vmax.xlane.f32.xlu0 %v362
    %v364 = vpop.xlane.xlu0 %363
    %v365 = vsel %vm343, %v342, -inf
    %366 = vmax.xlane.f32.xlu0 %v365
    %v367 = vpop.xlane.xlu0 %366
    %v368 = vsub.f32 %v335, %v346
    %v369 = vsub.f32 %v336, %v349
    %v370 = vsub.f32 %v337, %v352
    %v371 = vsub.f32 %v338, %v355
    %v372 = vsub.f32 %v339, %v358
    %v373 = vsub.f32 %v340, %v361
    %v374 = vsub.f32 %v341, %v364
    %v375 = vsub.f32 %v342, %v367
    %v376 = vmul.f32 %v368, 1.442695
    %v377 = vpow.pop %v376
    %v378 = vmul.f32 %v369, 1.442695
    %v379 = vpow.pop %v378
    %v380 = vmul.f32 %v370, 1.442695
    %v381 = vpow.pop %v380
    %v382 = vmul.f32 %v371, 1.442695
    %v383 = vpow.pop %v382
    %v384 = vmul.f32 %v372, 1.442695
    %v385 = vpow.pop %v384
    %v386 = vmul.f32 %v373, 1.442695
    %v387 = vpow.pop %v386
    %v388 = vmul.f32 %v374, 1.442695
    %v389 = vpow.pop %v388
    %v390 = vmul.f32 %v375, 1.442695
    %v391 = vpow.pop %v390
    %v392 = vsel %vm343, %v377, 0.0
    %393 = vadd.xlane.f32.xlu0 %v392
    %v394 = vpop.xlane.xlu0 %393
    %v395 = vsel %vm343, %v379, 0.0
    %396 = vadd.xlane.f32.xlu0 %v395
    %v397 = vpop.xlane.xlu0 %396
    %v398 = vsel %vm343, %v381, 0.0
    %399 = vadd.xlane.f32.xlu0 %v398
    %v400 = vpop.xlane.xlu0 %399
    %v401 = vsel %vm343, %v383, 0.0
    %402 = vadd.xlane.f32.xlu0 %v401
    %v403 = vpop.xlane.xlu0 %402
    %v404 = vsel %vm343, %v385, 0.0
    %405 = vadd.xlane.f32.xlu0 %v404
    %v406 = vpop.xlane.xlu0 %405
    %v407 = vsel %vm343, %v387, 0.0
    %408 = vadd.xlane.f32.xlu0 %v407
    %v409 = vpop.xlane.xlu0 %408
    %v410 = vsel %vm343, %v389, 0.0
    %411 = vadd.xlane.f32.xlu0 %v410
    %v412 = vpop.xlane.xlu0 %411
    %v413 = vsel %vm343, %v391, 0.0
    %414 = vadd.xlane.f32.xlu0 %v413
    %v415 = vpop.xlane.xlu0 %414
    %v416 = vrcp.pop %v394
    %v417 = vmul.f32 %v377, %v416
    %v418 = vrcp.pop %v397
    %v419 = vmul.f32 %v379, %v418
    %v420 = vrcp.pop %v400
    %v421 = vmul.f32 %v381, %v420
    %v422 = vrcp.pop %v403
    %v423 = vmul.f32 %v383, %v422
    %v424 = vrcp.pop %v406
    %v425 = vmul.f32 %v385, %v424
    %v426 = vrcp.pop %v409
    %v427 = vmul.f32 %v387, %v426
    %v428 = vrcp.pop %v412
    %v429 = vmul.f32 %v389, %v428
    %v430 = vrcp.pop %v415
    %v431 = vmul.f32 %v391, %v430
    %432 = vrot.lane.b32.xlu0 %v125, 64
    %v433 = vpop.permute.xlu0 %432
    %434 = vrot.lane.b32.xlu0 %v128, 64
    %v435 = vpop.permute.xlu0 %434
    %436 = vrot.lane.b32.xlu0 %v134, 64
    %v437 = vpop.permute.xlu0 %436
    %438 = vrot.lane.b32.xlu0 %v136, 64
    %v439 = vpop.permute.xlu0 %438
    %440 = vrot.lane.b32.xlu0 %v138, 64
    %v441 = vpop.permute.xlu0 %440
    %442 = vrot.lane.b32.xlu0 %v140, 64
    %v443 = vpop.permute.xlu0 %442
    %444 = vrot.lane.b32.xlu0 %v142, 64
    %v445 = vpop.permute.xlu0 %444
    %446 = vrot.lane.b32.xlu0 %v144, 64
    %v447 = vpop.permute.xlu0 %446
    %v457 = vsel %vm343, %v417, 0
    %v460 = vsel %vm343, %v419, 0
    %v463 = vsel %vm343, %v421, 0
    %v466 = vsel %vm343, %v423, 0
    %v469 = vsel %vm343, %v425, 0
    %v472 = vsel %vm343, %v427, 0
    %v475 = vsel %vm343, %v429, 0
    %v478 = vsel %vm343, %v431, 0
    %480 = vmatprep.subr.mxu0 0.0
    %481 = vmatpush1.msra.mxu0 %v433
    %482 = vmatprep.subr.mxu0 0.0
    %483 = vmatpush1.msra.mxu0 %v435
    %484 = vmatprep.subr.mxu0 0.0
    %485 = vmatpush1.msra.mxu0 %v437
    %486 = vmatprep.subr.mxu0 0.0
    %487 = vmatpush1.msra.mxu0 %v439
    %488 = vmatprep.subr.mxu0 0.0
    %489 = vmatpush1.msra.mxu0 %v441
    %490 = vmatprep.subr.mxu0 0.0
    %491 = vmatpush1.msra.mxu0 %v443
    %492 = vmatprep.subr.mxu0 0.0
    %493 = vmatpush1.msra.mxu0 %v445
    %494 = vmatprep.subr.mxu0 0.0
    %495 = vmatpush1.msra.mxu0 %v447
    %496 = vmatprep.subr.mxu0 0.0
    %497 = vmatpush1.msra.mxu0 0.0
    %498 = vmatprep.subr.mxu0 0.0
    %499 = vmatpush1.msra.mxu0 0.0
    %500 = vmatprep.subr.mxu0 0.0
    %501 = vmatpush1.msra.mxu0 0.0
    %502 = vmatprep.subr.mxu0 0.0
    %503 = vmatpush1.msra.mxu0 0.0
    %504 = vmatprep.subr.mxu0 0.0
    %505 = vmatpush1.msra.mxu0 0.0
    %506 = vmatprep.subr.mxu0 0.0
    %507 = vmatpush1.msra.mxu0 0.0
    %508 = vmatprep.subr.mxu0 0.0
    %509 = vmatpush1.msra.mxu0 0.0
    %510 = vmatprep.subr.mxu0 0.0
    %511 = vmatpush1.msra.mxu0 0.0
    %512 = vmatprep.subr.mxu0 0.0
    %513 = vmatpush1.msra.mxu0 0.0
    %514 = vmatprep.subr.mxu0 0.0
    %515 = vmatpush1.msra.mxu0 0.0
    %516 = vmatprep.subr.mxu0 0.0
    %517 = vmatpush1.msra.mxu0 0.0
    %518 = vmatprep.subr.mxu0 0.0
    %519 = vmatpush1.msra.mxu0 0.0
    %520 = vmatprep.subr.mxu0 0.0
    %521 = vmatpush1.msra.mxu0 0.0
    %522 = vmatprep.subr.mxu0 0.0
    %523 = vmatpush1.msra.mxu0 0.0
    %524 = vmatprep.subr.mxu0 0.0
    %525 = vmatpush1.msra.mxu0 0.0
    %526 = vmatprep.subr.mxu0 0.0
    %527 = vmatpush1.msra.mxu0 0.0
    %528 = vmatprep.subr.mxu0 0.0
    %529 = vmatpush1.msra.mxu0 0.0
    %530 = vmatprep.subr.mxu0 0.0
    %531 = vmatpush1.msra.mxu0 0.0
    %532 = vmatprep.subr.mxu0 0.0
    %533 = vmatpush1.msra.mxu0 0.0
    %534 = vmatprep.subr.mxu0 0.0
    %535 = vmatpush1.msra.mxu0 0.0
    %536 = vmatprep.subr.mxu0 0.0
    %537 = vmatpush1.msra.mxu0 0.0
    %538 = vmatprep.subr.mxu0 0.0
    %539 = vmatpush1.msra.mxu0 0.0
    %540 = vmatprep.subr.mxu0 0.0
    %541 = vmatpush1.msra.mxu0 0.0
    %542 = vmatprep.subr.mxu0 0.0
    %543 = vmatpush1.msra.mxu0 0.0
    %544 = vmatprep.mubr.f32.mxu0 0.0
    %545 = vmatmul.mubr.f32.gmra.mrb[0].mxu0 %v457
    %v546 = vpop.f32.mrb[0].mxu0
    %v547 = vadd.f32 0.0, %v546
    %v548 = vpop.f32.mrb[0].mxu0
    %549 = vmatprep.mubr.f32.mxu0 0.0
    %550 = vmatmul.mubr.f32.gmra.mrb[0].mxu0 %v460
    %v551 = vpop.f32.mrb[0].mxu0
    %v552 = vadd.f32 0.0, %v551
    %v553 = vpop.f32.mrb[0].mxu0
    %554 = vmatprep.mubr.f32.mxu0 0.0
    %555 = vmatmul.mubr.f32.gmra.mrb[0].mxu0 %v463
    %v556 = vpop.f32.mrb[0].mxu0
    %v557 = vadd.f32 0.0, %v556
    %v558 = vpop.f32.mrb[0].mxu0
    %559 = vmatprep.mubr.f32.mxu0 0.0
    %560 = vmatmul.mubr.f32.gmra.mrb[0].mxu0 %v466
    %v561 = vpop.f32.mrb[0].mxu0
    %v562 = vadd.f32 0.0, %v561
    %v563 = vpop.f32.mrb[0].mxu0
    %564 = vmatprep.mubr.f32.mxu0 0.0
    %565 = vmatmul.mubr.f32.gmra.mrb[0].mxu0 %v469
    %v566 = vpop.f32.mrb[0].mxu0
    %v567 = vadd.f32 0.0, %v566
    %v568 = vpop.f32.mrb[0].mxu0
    %569 = vmatprep.mubr.f32.mxu0 0.0
    %570 = vmatmul.mubr.f32.gmra.mrb[0].mxu0 %v472
    %v571 = vpop.f32.mrb[0].mxu0
    %v572 = vadd.f32 0.0, %v571
    %v573 = vpop.f32.mrb[0].mxu0
    %574 = vmatprep.mubr.f32.mxu0 0.0
    %575 = vmatmul.mubr.f32.gmra.mrb[0].mxu0 %v475
    %v576 = vpop.f32.mrb[0].mxu0
    %v577 = vadd.f32 0.0, %v576
    %v578 = vpop.f32.mrb[0].mxu0
    %579 = vmatprep.mubr.f32.mxu0 0.0
    %580 = vmatmul.mubr.f32.gmra.mrb[0].mxu0 %v478
    %v581 = vpop.f32.mrb[0].mxu0
    %v582 = vadd.f32 0.0, %v581
    %v583 = vpop.f32.mrb[0].mxu0
    %584 = vdwg.mxu0
    %587 = vrot.lane.b32.xlu0 %v557, 8
    %v588 = vpop.permute.xlu0 %587
    %589 = vrot.lane.b32.xlu0 %v562, 8
    %v590 = vpop.permute.xlu0 %589
    %595 = vrot.lane.b32.xlu0 %v567, 16
    %v596 = vpop.permute.xlu0 %595
    %597 = vrot.lane.b32.xlu0 %v572, 16
    %v598 = vpop.permute.xlu0 %597
    %603 = vrot.lane.b32.xlu0 %v577, 24
    %v604 = vpop.permute.xlu0 %603
    %605 = vrot.lane.b32.xlu0 %v582, 24
    %v606 = vpop.permute.xlu0 %605
    %v609 = vsel %vm161, %v547, %v588
    %v610 = vsel %vm161, %v552, %v590
    %vm611 = vcmask 130048
    %v612 = vsel %vm611, %v609, %v596
    %v613 = vsel %vm611, %v610, %v598
    %vm614 = vcmask 195584
    %v615 = vsel %vm614, %v612, %v604
    %v616 = vsel %vm614, %v613, %v606
    %v617 = vld [vmem:[%s1 + $0x4] sm:$0xf]
    %v618 = vld [vmem:[%s1 + $0x14] sm:$0xf]
    %v619 = vld [vmem:[%s1 + $0x24] sm:$0xf]
    %v620 = vld [vmem:[%s1 + $0x34] sm:$0xf]
    %v621 = vpack.c.bf16 %v616, %v615
    %v622 = vld [vmem:[#allocation2 + $0x50] ss:$0 sm:$0xff]
    %v627 = vunpack.c.l.b16 %v617
    %v628 = vunpack.c.l.b16 %v618
    %v629 = vunpack.c.l.b16 %v619
    %v630 = vunpack.c.l.b16 %v620
    %v631 = vpack.c.b16 %v628, %v627
    %v632 = vpack.c.b16 %v630, %v629
    %v636 = vsel %vm37, %v621, 0
    %638 = vmatprep.subr.bf16.mxu0 0
    %639 = vmatpush1.bf16.msra.mxu0 %v631
    %640 = vmatprep.subr.bf16.mxu0 0
    %641 = vmatpush1.bf16.msra.mxu0 %v632
    %642 = vmatprep.subr.bf16.mxu0 0
    %643 = vmatpush1.bf16.msra.mxu0 0
    %644 = vmatprep.subr.bf16.mxu0 0
    %645 = vmatpush1.bf16.msra.mxu0 0
    %646 = vmatprep.subr.bf16.mxu0 0
    %647 = vmatpush1.bf16.msra.mxu0 0
    %648 = vmatprep.subr.bf16.mxu0 0
    %649 = vmatpush1.bf16.msra.mxu0 0
    %650 = vmatprep.subr.bf16.mxu0 0
    %651 = vmatpush1.bf16.msra.mxu0 0
    %652 = vmatprep.subr.bf16.mxu0 0
    %653 = vmatpush1.bf16.msra.mxu0 0
    %654 = vmatprep.subr.bf16.mxu0 0
    %655 = vmatpush1.bf16.msra.mxu0 0
    %656 = vmatprep.subr.bf16.mxu0 0
    %657 = vmatpush1.bf16.msra.mxu0 0
    %658 = vmatprep.subr.bf16.mxu0 0
    %659 = vmatpush1.bf16.msra.mxu0 0
    %660 = vmatprep.subr.bf16.mxu0 0
    %661 = vmatpush1.bf16.msra.mxu0 0
    %662 = vmatprep.subr.bf16.mxu0 0
    %663 = vmatpush1.bf16.msra.mxu0 0
    %664 = vmatprep.subr.bf16.mxu0 0
    %665 = vmatpush1.bf16.msra.mxu0 0
    %666 = vmatprep.subr.bf16.mxu0 0
    %667 = vmatpush1.bf16.msra.mxu0 0
    %668 = vmatprep.subr.bf16.mxu0 0
    %669 = vmatpush1.bf16.msra.mxu0 0
    %670 = vmatprep.mubr.bf16.mxu0 0
    %671 = vmatmul.mubr.bf16.gmra.mrb[0].mxu0 %v636
    %v672 = vpop.f32.mrb[0].mxu0
    %v673 = vadd.f32 %v622, %v672
    %v674 = vpop.f32.mrb[0].mxu0
    %v675 = vpop.f32.mrb[0].mxu0
    %v676 = vadd.f32 %v622, %v675
    %v677 = vpop.f32.mrb[0].mxu0
    %678 = vdwg.mxu0
    %v679 = vadd.f32 %v33, %v673
    %v680 = vadd.f32 %v34, %v676
    %v681 = vld [vmem:[#allocation2 + $0x20] ss:$0 sm:$0xff]
    %v682 = vld [vmem:[#allocation2 + $0x30] ss:$0 sm:$0xff]
    %v683 = vsel %vm37, %v679, 0.0
    %684 = vadd.xlane.f32.xlu0 %v683
    %v685 = vpop.xlane.xlu0 %684
    %v686 = vsel %vm37, %v680, 0.0
    %687 = vadd.xlane.f32.xlu0 %v686
    %v688 = vpop.xlane.xlu0 %687
    %v689 = vmul.f32 %v685, %v44
    %v690 = vmul.f32 %v688, %v44
    %v691 = vsub.f32 %v679, %v689
    %v692 = vsub.f32 %v680, %v690
    %v693 = vmul.f32 %v691, %v691
    %v694 = vmul.f32 %v692, %v692
    %v695 = vsel %vm37, %v693, 0.0
    %696 = vadd.xlane.f32.xlu0 %v695
    %v697 = vpop.xlane.xlu0 %696
    %v698 = vsel %vm37, %v694, 0.0
    %699 = vadd.xlane.f32.xlu0 %v698
    %v700 = vpop.xlane.xlu0 %699
    %v701 = vmul.f32 %v697, %v44
    %v702 = vmul.f32 %v700, %v44
    %v703 = vadd.f32 %v701, 1e-05
    %v704 = vadd.f32 %v702, 1e-05
    %v705 = vrsqrt.pop %v703
    %v706 = vrsqrt.pop %v704
    %v707 = vmul.f32 %v691, %v705
    %v708 = vmul.f32 %v692, %v706
    %v709 = vmul.f32 %v707, %v681
    %v710 = vmul.f32 %v708, %v681
    %v711 = vadd.f32 %v709, %v682
    %v712 = vadd.f32 %v710, %v682
    %v713 = vld [vmem:[#allocation2 + $0x80] sm:$0xff]
    %v714 = vld [vmem:[#allocation2 + $0x90] sm:$0xff]
    %v715 = vld [vmem:[#allocation2 + $0xa0] sm:$0xff]
    %v716 = vld [vmem:[#allocation2 + $0xb0] sm:$0xff]
    %v717 = vld [vmem:[#allocation2 + $0x60] ss:$0 sm:$0xff]
    %v719 = vsel %vm37, %v711, 0
    %v722 = vsel %vm37, %v712, 0
    %724 = vmatprep.subr.mxu0 0.0
    %725 = vmatpush1.msra.mxu0 %v713
    %726 = vmatprep.subr.mxu0 0.0
    %727 = vmatpush1.msra.mxu0 %v714
    %728 = vmatprep.subr.mxu0 0.0
    %729 = vmatpush1.msra.mxu0 %v715
    %730 = vmatprep.subr.mxu0 0.0
    %731 = vmatpush1.msra.mxu0 %v716
    %732 = vmatprep.subr.mxu0 0.0
    %733 = vmatpush1.msra.mxu0 0.0
    %734 = vmatprep.subr.mxu0 0.0
    %735 = vmatpush1.msra.mxu0 0.0
    %736 = vmatprep.subr.mxu0 0.0
    %737 = vmatpush1.msra.mxu0 0.0
    %738 = vmatprep.subr.mxu0 0.0
    %739 = vmatpush1.msra.mxu0 0.0
    %740 = vmatprep.subr.mxu0 0.0
    %741 = vmatpush1.msra.mxu0 0.0
    %742 = vmatprep.subr.mxu0 0.0
    %743 = vmatpush1.msra.mxu0 0.0
    %744 = vmatprep.subr.mxu0 0.0
    %745 = vmatpush1.msra.mxu0 0.0
    %746 = vmatprep.subr.mxu0 0.0
    %747 = vmatpush1.msra.mxu0 0.0
    %748 = vmatprep.subr.mxu0 0.0
    %749 = vmatpush1.msra.mxu0 0.0
    %750 = vmatprep.subr.mxu0 0.0
    %751 = vmatpush1.msra.mxu0 0.0
    %752 = vmatprep.subr.mxu0 0.0
    %753 = vmatpush1.msra.mxu0 0.0
    %754 = vmatprep.subr.mxu0 0.0
    %755 = vmatpush1.msra.mxu0 0.0
    %756 = vmatprep.subr.mxu0 0.0
    %757 = vmatpush1.msra.mxu0 0.0
    %758 = vmatprep.subr.mxu0 0.0
    %759 = vmatpush1.msra.mxu0 0.0
    %760 = vmatprep.subr.mxu0 0.0
    %761 = vmatpush1.msra.mxu0 0.0
    %762 = vmatprep.subr.mxu0 0.0
    %763 = vmatpush1.msra.mxu0 0.0
    %764 = vmatprep.subr.mxu0 0.0
    %765 = vmatpush1.msra.mxu0 0.0
    %766 = vmatprep.subr.mxu0 0.0
    %767 = vmatpush1.msra.mxu0 0.0
    %768 = vmatprep.subr.mxu0 0.0
    %769 = vmatpush1.msra.mxu0 0.0
    %770 = vmatprep.subr.mxu0 0.0
    %771 = vmatpush1.msra.mxu0 0.0
    %772 = vmatprep.subr.mxu0 0.0
    %773 = vmatpush1.msra.mxu0 0.0
    %774 = vmatprep.subr.mxu0 0.0
    %775 = vmatpush1.msra.mxu0 0.0
    %776 = vmatprep.subr.mxu0 0.0
    %777 = vmatpush1.msra.mxu0 0.0
    %778 = vmatprep.subr.mxu0 0.0
    %779 = vmatpush1.msra.mxu0 0.0
    %780 = vmatprep.subr.mxu0 0.0
    %781 = vmatpush1.msra.mxu0 0.0
    %782 = vmatprep.subr.mxu0 0.0
    %783 = vmatpush1.msra.mxu0 0.0
    %784 = vmatprep.subr.mxu0 0.0
    %785 = vmatpush1.msra.mxu0 0.0
    %786 = vmatprep.subr.mxu0 0.0
    %787 = vmatpush1.msra.mxu0 0.0
    %788 = vmatprep.mubr.f32.mxu0 0.0
    %789 = vmatmul.mubr.f32.gmra.mrb[0].mxu0 %v719
    %v790 = vpop.f32.mrb[0].mxu0
    %v791 = vadd.f32 %v717, %v790
    %v792 = vpop.f32.mrb[0].mxu0
    %793 = vmatprep.mubr.f32.mxu0 0.0
    %794 = vmatmul.mubr.f32.gmra.mrb[0].mxu0 %v722
    %v795 = vpop.f32.mrb[0].mxu0
    %v796 = vadd.f32 %v717, %v795
    %v797 = vpop.f32.mrb[0].mxu0
    %798 = vdwg.mxu0
    %vm799 = vcmask 31744
    %v800 = vsel %vm799, %v791, -inf
    %801 = vmax.xlane.f32.xlu0 %v800
    %v802 = vpop.xlane.xlu0 %801
    %v803 = vsel %vm799, %v796, -inf
    %804 = vmax.xlane.f32.xlu0 %v803
    %v805 = vpop.xlane.xlu0 %804
    %v806 = vsub.f32 %v791, %v802
    %v807 = vsub.f32 %v796, %v805
    %v808 = vmul.f32 %v806, 1.442695
    %v809 = vpow.pop %v808
    %v810 = vmul.f32 %v807, 1.442695
    %v811 = vpow.pop %v810
    %v812 = vsel %vm799, %v809, 0.0
    %813 = vadd.xlane.f32.xlu0 %v812
    %v814 = vpop.xlane.xlu0 %813
    %v815 = vsel %vm799, %v811, 0.0
    %816 = vadd.xlane.f32.xlu0 %v815
    %v817 = vpop.xlane.xlu0 %816
    %v818 = vrcp.pop %v814
    %v819 = vmul.f32 %v809, %v818
    %v820 = vrcp.pop %v817
    %v821 = vmul.f32 %v811, %v820
    %v822 = vcvt.s32.f32 %v317
    %v823 = vsel %vm799, %v819, -inf
    %824 = vmax.xlane.f32.xlu0 %v823
    %v825 = vpop.xlane.xlu0 %824
    %v826 = vsel %vm799, %v821, -inf
    %827 = vmax.xlane.f32.xlu0 %v826
    %v828 = vpop.xlane.xlu0 %827
    %vm829 = vcmp.ge.f32.partialorder %v819, %v825
    %vm830 = vcmp.ge.f32.partialorder %v821, %v828
    %v831 = vsel %vm829, %v822, 4.0
    %v832 = vsel %vm830, %v822, 4.0
    %v833 = vsel %vm799, %v831, inf
    %834 = vmin.xlane.f32.xlu0 %v833
    %v835 = vpop.xlane.xlu0 %834
    %v836 = vsel %vm799, %v832, inf
    %837 = vmin.xlane.f32.xlu0 %v836
    %v838 = vpop.xlane.xlu0 %837
    %vm839 = vcmp.eq.f32.partialorder %v822, %v835
    %vm840 = vcmp.eq.f32.partialorder %v822, %v838
    %v841 = vsel %vm839, -1.0, %v819
    %v842 = vsel %vm840, -1.0, %v821
    %v843 = vsel %vm799, %v841, -inf
    %844 = vmax.xlane.f32.xlu0 %v843
    %v845 = vpop.xlane.xlu0 %844
    %v846 = vsel %vm799, %v842, -inf
    %847 = vmax.xlane.f32.xlu0 %v846
    %v848 = vpop.xlane.xlu0 %847
    %vm849 = vcmp.ge.f32.partialorder %v841, %v845
    %vm850 = vcmp.ge.f32.partialorder %v842, %v848
    %v851 = vsel %vm849, %v822, 4.0
    %v852 = vsel %vm850, %v822, 4.0
    %v853 = vsel %vm799, %v851, inf
    %854 = vmin.xlane.f32.xlu0 %v853
    %v855 = vpop.xlane.xlu0 %854
    %v856 = vsel %vm799, %v852, inf
    %857 = vmin.xlane.f32.xlu0 %v856
    %v858 = vpop.xlane.xlu0 %857
    %vm859 = vcmp.eq.f32.partialorder %v822, %v855
    %vm860 = vcmp.eq.f32.partialorder %v822, %v858
    %v861 = vsel %vm839, %v825, 0.0
    %v862 = vsel %vm840, %v828, 0.0
    %v863 = vsel %vm859, %v845, 0.0
    %v864 = vsel %vm860, %v848, 0.0
    %v865 = vadd.f32 %v861, %v863
    %v866 = vadd.f32 %v862, %v864
    %v867 = vadd.f32 %v825, %v845
    %v868 = vadd.f32 %v828, %v848
    %v869 = vrcp.pop %v867
    %v870 = vmul.f32 %v865, %v869
    %v871 = vrcp.pop %v868
    %v872 = vmul.f32 %v866, %v871
    %v873 = vld [vmem:[%s1 + $0x8] sm:$0xff]
    %v874 = vld [vmem:[%s1 + $0x18] sm:$0xff]
    %v875 = vld [vmem:[%s1 + $0x28] sm:$0xff]
    %v876 = vld [vmem:[%s1 + $0x38] sm:$0xff]
    %v877 = vpack.c.bf16 %v712, %v711
    %s878 = scalar_lea.vmem [#allocation2], 112
    %v879 = vld [vmem:[%s878] ss:$8 sm:$0x3]
    %v881 = vlaneseq
    %v882 = vshrl.u32 %v881, 7
    %v883 = vsub.s32 0, %v882
    %v884 = vrot.slane %v879, %v883
    %v885 = vlaneseq
    %v886 = vshrl.u32 %v885, 7
    %v887 = vsub.s32 1, %v886
    %v888 = vrot.slane %v879, %v887
    %v895 = vunpack.c.l.b16 %v873
    %v896 = vunpack.c.h.b16 %v873
    %v897 = vunpack.c.l.b16 %v874
    %v898 = vunpack.c.h.b16 %v874
    %v899 = vunpack.c.l.b16 %v875
    %v900 = vunpack.c.h.b16 %v875
    %v901 = vunpack.c.l.b16 %v876
    %v902 = vunpack.c.h.b16 %v876
    %v903 = vpack.c.b16 %v897, %v895
    %v904 = vpack.c.b16 %v898, %v896
    %v905 = vpack.c.b16 %v901, %v899
    %v906 = vpack.c.b16 %v902, %v900
    %v912 = vsel %vm37, %v877, 0
    %914 = vmatprep.subr.bf16.mxu0 %v904
    %915 = vmatpush1.bf16.msra.mxu0 %v903
    %916 = vmatprep.subr.bf16.mxu0 %v906
    %917 = vmatpush1.bf16.msra.mxu0 %v905
    %918 = vmatprep.subr.bf16.mxu0 0
    %919 = vmatpush1.bf16.msra.mxu0 0
    %920 = vmatprep.subr.bf16.mxu0 0
    %921 = vmatpush1.bf16.msra.mxu0 0
    %922 = vmatprep.subr.bf16.mxu0 0
    %923 = vmatpush1.bf16.msra.mxu0 0
    %924 = vmatprep.subr.bf16.mxu0 0
    %925 = vmatpush1.bf16.msra.mxu0 0
    %926 = vmatprep.subr.bf16.mxu0 0
    %927 = vmatpush1.bf16.msra.mxu0 0
    %928 = vmatprep.subr.bf16.mxu0 0
    %929 = vmatpush1.bf16.msra.mxu0 0
    %930 = vmatprep.subr.bf16.mxu0 0
    %931 = vmatpush1.bf16.msra.mxu0 0
    %932 = vmatprep.subr.bf16.mxu0 0
    %933 = vmatpush1.bf16.msra.mxu0 0
    %934 = vmatprep.subr.bf16.mxu0 0
    %935 = vmatpush1.bf16.msra.mxu0 0
    %936 = vmatprep.subr.bf16.mxu0 0
    %937 = vmatpush1.bf16.msra.mxu0 0
    %938 = vmatprep.subr.bf16.mxu0 0
    %939 = vmatpush1.bf16.msra.mxu0 0
    %940 = vmatprep.subr.bf16.mxu0 0
    %941 = vmatpush1.bf16.msra.mxu0 0
    %942 = vmatprep.subr.bf16.mxu0 0
    %943 = vmatpush1.bf16.msra.mxu0 0
    %944 = vmatprep.subr.bf16.mxu0 0
    %945 = vmatpush1.bf16.msra.mxu0 0
    %946 = vmatprep.mubr.bf16.mxu0 0
    %947 = vmatmul.mubr.bf16.gmra.mrb[0].mxu0 %v912
    %v948 = vpop.f32.mrb[0].mxu0
    %v949 = vadd.f32 %v884, %v948
    %v950 = vpop.f32.mrb[0].mxu0
    %v951 = vadd.f32 %v888, %v950
    %v952 = vpop.f32.mrb[0].mxu0
    %v953 = vadd.f32 %v884, %v952
    %v954 = vpop.f32.mrb[0].mxu0
    %v955 = vadd.f32 %v888, %v954
    %956 = vdwg.mxu0
    %v957 = vmax.f32 %v949, 0.0
    %v958 = vmax.f32 %v951, 0.0
    %v959 = vmax.f32 %v953, 0.0
    %v960 = vmax.f32 %v955, 0.0
    %v961 = vld [vmem:[#allocation2 + $0xc0] sm:$0xf]
    %v962 = vld [vmem:[#allocation2 + $0xc8] sm:$0xf]
    %v964 = vsel %vm799, %v870, 0
    %v967 = vsel %vm799, %v872, 0
    %vm969 = vcmask 1043456
    %v971 = vsel %vm969, %v961, 0
    %v974 = vsel %vm969, %v962, 0
    %976 = vmatprep.subr.mxu0 %v974
    %977 = vmatpush1.msra.mxu0 %v971
    %978 = vmatprep.subr.mxu0 0.0
    %979 = vmatpush1.msra.mxu0 0.0
    %980 = vmatprep.subr.mxu0 0.0
    %981 = vmatpush1.msra.mxu0 0.0
    %982 = vmatprep.subr.mxu0 0.0
    %983 = vmatpush1.msra.mxu0 0.0
    %984 = vmatprep.subr.mxu0 0.0
    %985 = vmatpush1.msra.mxu0 0.0
    %986 = vmatprep.subr.mxu0 0.0
    %987 = vmatpush1.msra.mxu0 0.0
    %988 = vmatprep.subr.mxu0 0.0
    %989 = vmatpush1.msra.mxu0 0.0
    %990 = vmatprep.subr.mxu0 0.0
    %991 = vmatpush1.msra.mxu0 0.0
    %992 = vmatprep.subr.mxu0 0.0
    %993 = vmatpush1.msra.mxu0 0.0
    %994 = vmatprep.subr.mxu0 0.0
    %995 = vmatpush1.msra.mxu0 0.0
    %996 = vmatprep.subr.mxu0 0.0
    %997 = vmatpush1.msra.mxu0 0.0
    %998 = vmatprep.subr.mxu0 0.0
    %999 = vmatpush1.msra.mxu0 0.0
    %1000 = vmatprep.subr.mxu0 0.0
    %1001 = vmatpush1.msra.mxu0 0.0
    %1002 = vmatprep.subr.mxu0 0.0
    %1003 = vmatpush1.msra.mxu0 0.0
    %1004 = vmatprep.subr.mxu0 0.0
    %1005 = vmatpush1.msra.mxu0 0.0
    %1006 = vmatprep.subr.mxu0 0.0
    %1007 = vmatpush1.msra.mxu0 0.0
    %1008 = vmatprep.subr.mxu0 0.0
    %1009 = vmatpush1.msra.mxu0 0.0
    %1010 = vmatprep.subr.mxu0 0.0
    %1011 = vmatpush1.msra.mxu0 0.0
    %1012 = vmatprep.subr.mxu0 0.0
    %1013 = vmatpush1.msra.mxu0 0.0
    %1014 = vmatprep.subr.mxu0 0.0
    %1015 = vmatpush1.msra.mxu0 0.0
    %1016 = vmatprep.subr.mxu0 0.0
    %1017 = vmatpush1.msra.mxu0 0.0
    %1018 = vmatprep.subr.mxu0 0.0
    %1019 = vmatpush1.msra.mxu0 0.0
    %1020 = vmatprep.subr.mxu0 0.0
    %1021 = vmatpush1.msra.mxu0 0.0
    %1022 = vmatprep.subr.mxu0 0.0
    %1023 = vmatpush1.msra.mxu0 0.0
    %1024 = vmatprep.subr.mxu0 0.0
    %1025 = vmatpush1.msra.mxu0 0.0
    %1026 = vmatprep.subr.mxu0 0.0
    %1027 = vmatpush1.msra.mxu0 0.0
    %1028 = vmatprep.subr.mxu0 0.0
    %1029 = vmatpush1.msra.mxu0 0.0
    %1030 = vmatprep.subr.mxu0 0.0
    %1031 = vmatpush1.msra.mxu0 0.0
    %1032 = vmatprep.subr.mxu0 0.0
    %1033 = vmatpush1.msra.mxu0 0.0
    %1034 = vmatprep.subr.mxu0 0.0
    %1035 = vmatpush1.msra.mxu0 0.0
    %1036 = vmatprep.subr.mxu0 0.0
    %1037 = vmatpush1.msra.mxu0 0.0
    %1038 = vmatprep.subr.mxu0 0.0
    %1039 = vmatpush1.msra.mxu0 0.0
    %1040 = vmatprep.mubr.f32.mxu0 0.0
    %1041 = vmatmul.mubr.f32.gmra.mrb[0].mxu0 %v964
    %v1042 = vpop.f32.mrb[0].mxu0
    %v1043 = vadd.f32 0.0, %v1042
    %v1044 = vpop.f32.mrb[0].mxu0
    %v1045 = vadd.f32 0.0, %v1044
    %1046 = vmatprep.mubr.f32.mxu0 0.0
    %1047 = vmatmul.mubr.f32.gmra.mrb[0].mxu0 %v967
    %v1048 = vpop.f32.mrb[0].mxu0
    %v1049 = vadd.f32 0.0, %v1048
    %v1050 = vpop.f32.mrb[0].mxu0
    %v1051 = vadd.f32 0.0, %v1050
    %1052 = vdwg.mxu0
    %v1053 = vmul.f32 %v957, %v1043
    %v1054 = vmul.f32 %v958, %v1045
    %v1055 = vmul.f32 %v959, %v1049
    %v1056 = vmul.f32 %v960, %v1051
    %v1057 = vld [vmem:[%s2] sm:$0xf]
    %v1058 = vld [vmem:[%s2 + $0x4] sm:$0xf]
    %v1059 = vld [vmem:[%s2 + $0x8] sm:$0xf]
    %v1060 = vld [vmem:[%s2 + $0xc] sm:$0xf]
    %v1061 = vld [vmem:[%s2 + $0x10] sm:$0xf]
    %v1062 = vld [vmem:[%s2 + $0x14] sm:$0xf]
    %v1063 = vld [vmem:[%s2 + $0x18] sm:$0xf]
    %v1064 = vld [vmem:[%s2 + $0x1c] sm:$0xf]
    %v1065 = vld [vmem:[%s2 + $0x20] sm:$0xf]
    %v1066 = vld [vmem:[%s2 + $0x24] sm:$0xf]
    %v1067 = vld [vmem:[%s2 + $0x28] sm:$0xf]
    %v1068 = vld [vmem:[%s2 + $0x2c] sm:$0xf]
    %v1069 = vld [vmem:[%s2 + $0x30] sm:$0xf]
    %v1070 = vld [vmem:[%s2 + $0x34] sm:$0xf]
    %v1071 = vld [vmem:[%s2 + $0x38] sm:$0xf]
    %v1072 = vld [vmem:[%s2 + $0x3c] sm:$0xf]
    %v1073 = vld [vmem:[%s2 + $0x40] sm:$0xf]
    %v1074 = vld [vmem:[%s2 + $0x44] sm:$0xf]
    %v1075 = vld [vmem:[%s2 + $0x48] sm:$0xf]
    %v1076 = vld [vmem:[%s2 + $0x4c] sm:$0xf]
    %v1077 = vld [vmem:[%s2 + $0x50] sm:$0xf]
    %v1078 = vld [vmem:[%s2 + $0x54] sm:$0xf]
    %v1079 = vld [vmem:[%s2 + $0x58] sm:$0xf]
    %v1080 = vld [vmem:[%s2 + $0x5c] sm:$0xf]
    %v1081 = vld [vmem:[%s2 + $0x60] sm:$0xf]
    %v1082 = vld [vmem:[%s2 + $0x64] sm:$0xf]
    %v1083 = vld [vmem:[%s2 + $0x68] sm:$0xf]
    %v1084 = vld [vmem:[%s2 + $0x6c] sm:$0xf]
    %v1085 = vld [vmem:[%s2 + $0x70] sm:$0xf]
    %v1086 = vld [vmem:[%s2 + $0x74] sm:$0xf]
    %v1087 = vld [vmem:[%s2 + $0x78] sm:$0xf]
    %v1088 = vld [vmem:[%s2 + $0x7c] sm:$0xf]
    %v1089 = vpack.c.bf16 %v1055, %v1053
    %v1090 = vpack.c.bf16 %v1056, %v1054
    %v1091 = vld [vmem:[#allocation2 + $0xd0] sm:$0xf]
    %v1093 = vsel %vm969, %v1091, 0
    %1095 = vmatprep.subr.mxu0 0.0
    %1096 = vmatpush1.msra.mxu0 %v1093
    %1097 = vmatprep.subr.mxu0 0.0
    %1098 = vmatpush1.msra.mxu0 0.0
    %1099 = vmatprep.subr.mxu0 0.0
    %1100 = vmatpush1.msra.mxu0 0.0
    %1101 = vmatprep.subr.mxu0 0.0
    %1102 = vmatpush1.msra.mxu0 0.0
    %1103 = vmatprep.subr.mxu0 0.0
    %1104 = vmatpush1.msra.mxu0 0.0
    %1105 = vmatprep.subr.mxu0 0.0
    %1106 = vmatpush1.msra.mxu0 0.0
    %1107 = vmatprep.subr.mxu0 0.0
    %1108 = vmatpush1.msra.mxu0 0.0
    %1109 = vmatprep.subr.mxu0 0.0
    %1110 = vmatpush1.msra.mxu0 0.0
    %1111 = vmatprep.subr.mxu0 0.0
    %1112 = vmatpush1.msra.mxu0 0.0
    %1113 = vmatprep.subr.mxu0 0.0
    %1114 = vmatpush1.msra.mxu0 0.0
    %1115 = vmatprep.subr.mxu0 0.0
    %1116 = vmatpush1.msra.mxu0 0.0
    %1117 = vmatprep.subr.mxu0 0.0
    %1118 = vmatpush1.msra.mxu0 0.0
    %1119 = vmatprep.subr.mxu0 0.0
    %1120 = vmatpush1.msra.mxu0 0.0
    %1121 = vmatprep.subr.mxu0 0.0
    %1122 = vmatpush1.msra.mxu0 0.0
    %1123 = vmatprep.subr.mxu0 0.0
    %1124 = vmatpush1.msra.mxu0 0.0
    %1125 = vmatprep.subr.mxu0 0.0
    %1126 = vmatpush1.msra.mxu0 0.0
    %1127 = vmatprep.subr.mxu0 0.0
    %1128 = vmatpush1.msra.mxu0 0.0
    %1129 = vmatprep.subr.mxu0 0.0
    %1130 = vmatpush1.msra.mxu0 0.0
    %1131 = vmatprep.subr.mxu0 0.0
    %1132 = vmatpush1.msra.mxu0 0.0
    %1133 = vmatprep.subr.mxu0 0.0
    %1134 = vmatpush1.msra.mxu0 0.0
    %1135 = vmatprep.subr.mxu0 0.0
    %1136 = vmatpush1.msra.mxu0 0.0
    %1137 = vmatprep.subr.mxu0 0.0
    %1138 = vmatpush1.msra.mxu0 0.0
    %1139 = vmatprep.subr.mxu0 0.0
    %1140 = vmatpush1.msra.mxu0 0.0
    %1141 = vmatprep.subr.mxu0 0.0
    %1142 = vmatpush1.msra.mxu0 0.0
    %1143 = vmatprep.subr.mxu0 0.0
    %1144 = vmatpush1.msra.mxu0 0.0
    %1145 = vmatprep.subr.mxu0 0.0
    %1146 = vmatpush1.msra.mxu0 0.0
    %1147 = vmatprep.subr.mxu0 0.0
    %1148 = vmatpush1.msra.mxu0 0.0
    %1149 = vmatprep.subr.mxu0 0.0
    %1150 = vmatpush1.msra.mxu0 0.0
    %1151 = vmatprep.subr.mxu0 0.0
    %1152 = vmatpush1.msra.mxu0 0.0
    %1153 = vmatprep.subr.mxu0 0.0
    %1154 = vmatpush1.msra.mxu0 0.0
    %1155 = vmatprep.subr.mxu0 0.0
    %1156 = vmatpush1.msra.mxu0 0.0
    %1157 = vmatprep.subr.mxu0 0.0
    %1158 = vmatpush1.msra.mxu0 0.0
    %1159 = vmatprep.mubr.f32.mxu0 0.0
    %1160 = vmatmul.mubr.f32.gmra.mrb[0].mxu0 %v964
    %v1161 = vpop.f32.mrb[0].mxu0
    %v1162 = vadd.f32 0.0, %v1161
    %v1163 = vpop.f32.mrb[0].mxu0
    %1164 = vmatprep.mubr.f32.mxu0 0.0
    %1165 = vmatmul.mubr.f32.gmra.mrb[0].mxu0 %v967
    %v1166 = vpop.f32.mrb[0].mxu0
    %v1167 = vadd.f32 0.0, %v1166
    %v1168 = vpop.f32.mrb[0].mxu0
    %1169 = vdwg.mxu0
    %v1202 = vunpack.c.l.b16 %v1057
    %v1203 = vunpack.c.l.b16 %v1058
    %v1204 = vunpack.c.l.b16 %v1059
    %v1205 = vunpack.c.l.b16 %v1060
    %v1206 = vunpack.c.l.b16 %v1061
    %v1207 = vunpack.c.l.b16 %v1062
    %v1208 = vunpack.c.l.b16 %v1063
    %v1209 = vunpack.c.l.b16 %v1064
    %v1210 = vunpack.c.l.b16 %v1065
    %v1211 = vunpack.c.l.b16 %v1066
    %v1212 = vunpack.c.l.b16 %v1067
    %v1213 = vunpack.c.l.b16 %v1068
    %v1214 = vunpack.c.l.b16 %v1069
    %v1215 = vunpack.c.l.b16 %v1070
    %v1216 = vunpack.c.l.b16 %v1071
    %v1217 = vunpack.c.l.b16 %v1072
    %v1218 = vunpack.c.l.b16 %v1073
    %v1219 = vunpack.c.l.b16 %v1074
    %v1220 = vunpack.c.l.b16 %v1075
    %v1221 = vunpack.c.l.b16 %v1076
    %v1222 = vunpack.c.l.b16 %v1077
    %v1223 = vunpack.c.l.b16 %v1078
    %v1224 = vunpack.c.l.b16 %v1079
    %v1225 = vunpack.c.l.b16 %v1080
    %v1226 = vunpack.c.l.b16 %v1081
    %v1227 = vunpack.c.l.b16 %v1082
    %v1228 = vunpack.c.l.b16 %v1083
    %v1229 = vunpack.c.l.b16 %v1084
    %v1230 = vunpack.c.l.b16 %v1085
    %v1231 = vunpack.c.l.b16 %v1086
    %v1232 = vunpack.c.l.b16 %v1087
    %v1233 = vunpack.c.l.b16 %v1088
    %v1234 = vpack.c.b16 %v1203, %v1202
    %v1235 = vpack.c.b16 %v1205, %v1204
    %v1236 = vpack.c.b16 %v1207, %v1206
    %v1237 = vpack.c.b16 %v1209, %v1208
    %v1238 = vpack.c.b16 %v1211, %v1210
    %v1239 = vpack.c.b16 %v1213, %v1212
    %v1240 = vpack.c.b16 %v1215, %v1214
    %v1241 = vpack.c.b16 %v1217, %v1216
    %v1242 = vpack.c.b16 %v1219, %v1218
    %v1243 = vpack.c.b16 %v1221, %v1220
    %v1244 = vpack.c.b16 %v1223, %v1222
    %v1245 = vpack.c.b16 %v1225, %v1224
    %v1246 = vpack.c.b16 %v1227, %v1226
    %v1247 = vpack.c.b16 %v1229, %v1228
    %v1248 = vpack.c.b16 %v1231, %v1230
    %v1249 = vpack.c.b16 %v1233, %v1232
    %1266 = vmatprep.subr.bf16.mxu0 0
    %1267 = vmatpush1.bf16.msra.mxu0 %v1234
    %1268 = vmatprep.subr.bf16.mxu0 0
    %1269 = vmatpush1.bf16.msra.mxu0 %v1235
    %1270 = vmatprep.subr.bf16.mxu0 0
    %1271 = vmatpush1.bf16.msra.mxu0 %v1236
    %1272 = vmatprep.subr.bf16.mxu0 0
    %1273 = vmatpush1.bf16.msra.mxu0 %v1237
    %1274 = vmatprep.subr.bf16.mxu0 0
    %1275 = vmatpush1.bf16.msra.mxu0 %v1238
    %1276 = vmatprep.subr.bf16.mxu0 0
    %1277 = vmatpush1.bf16.msra.mxu0 %v1239
    %1278 = vmatprep.subr.bf16.mxu0 0
    %1279 = vmatpush1.bf16.msra.mxu0 %v1240
    %1280 = vmatprep.subr.bf16.mxu0 0
    %1281 = vmatpush1.bf16.msra.mxu0 %v1241
    %1282 = vmatprep.subr.bf16.mxu0 0
    %1283 = vmatpush1.bf16.msra.mxu0 %v1242
    %1284 = vmatprep.subr.bf16.mxu0 0
    %1285 = vmatpush1.bf16.msra.mxu0 %v1243
    %1286 = vmatprep.subr.bf16.mxu0 0
    %1287 = vmatpush1.bf16.msra.mxu0 %v1244
    %1288 = vmatprep.subr.bf16.mxu0 0
    %1289 = vmatpush1.bf16.msra.mxu0 %v1245
    %1290 = vmatprep.subr.bf16.mxu0 0
    %1291 = vmatpush1.bf16.msra.mxu0 %v1246
    %1292 = vmatprep.subr.bf16.mxu0 0
    %1293 = vmatpush1.bf16.msra.mxu0 %v1247
    %1294 = vmatprep.subr.bf16.mxu0 0
    %1295 = vmatpush1.bf16.msra.mxu0 %v1248
    %1296 = vmatprep.subr.bf16.mxu0 0
    %1297 = vmatpush1.bf16.msra.mxu0 %v1249
    %1298 = vmatprep.mubr.bf16.mxu0 %v1090
    %1299 = vmatmul.mubr.bf16.gmra.mrb[0].mxu0 %v1089
    %v1300 = vpop.f32.mrb[0].mxu0
    %v1301 = vadd.f32 %v1162, %v1300
    %v1302 = vpop.f32.mrb[0].mxu0
    %v1303 = vpop.f32.mrb[0].mxu0
    %v1304 = vadd.f32 %v1167, %v1303
    %v1305 = vpop.f32.mrb[0].mxu0
    %1306 = vdwg.mxu0
    %v1307 = vadd.f32 %v679, %v1301
    %v1308 = vadd.f32 %v680, %v1304
    %1309 = vst.msk [vmem:[#allocation5] sm:$0xff] %vm37, %v1307
    %1310 = vst.msk [vmem:[#allocation5 + $0x8] sm:$0xff] %vm37, %v1308
    // Predicated region
    $region22: #{tpu_custom_call.1} parent=1 // pred_check
      _
    $region23: #{tpu_custom_call.1} parent=1 // pred_check_branch
      %1312 = sbr.rel (0) target = $region25
    $region24: #{tpu_custom_call.1} parent=1 // pred_region
      %s1314 = ssub.s32 256, 256
      %1315 = vsyncadd [#allocation4], %s1314
      %s1316 = sshll.u32 [#allocation5], 4
      %s1317 = int_to_ptr.vmem [resolvable:$true] %s1316
      %1322 = dma.vmem_to_hbm [thread:$0]  %s1317, 256, %s4, [#allocation4], 128, 128, 8
    $region25: #{tpu_custom_call.1} parent=1 // pred_fallthru
      _
    // Predicated region
    $region26: #{tpu_custom_call.1} parent=1 // pred_check
      _
    $region27: #{tpu_custom_call.1} parent=1 // pred_check_branch
      %1324 = sbr.rel (0) target = $region29
    $region28: #{tpu_custom_call.1} parent=1 // pred_region
      %1325 = dma.done [#allocation4], 256
    $region29: #{tpu_custom_call.1} parent=1 // pred_fallthru
      _
    %1326 = vsyncpa [#allocation3], 1
    %1327 = vsyncpa [#allocation4], 1

</llo_original>
